<compile_context>
chip_gen: v6e
topology: v6e:2x2x1
jax: 0.10.0
libtpu: 0.0.40
codegen_flags: <defaults>
</compile_context>

<pallas_src>
import math
import numpy as np

import jax
import jax.numpy as jnp
from jax import lax
from jax.experimental import pallas as pl
from jax.experimental.pallas import tpu as pltpu


# ----------------------------- in-kernel math helpers -----------------------------

def _erf(z):
    # TODO(synk): Mosaic has no native erf lowering; Abramowitz–Stegun 7.1.26
    # (|abs err| < 1.5e-7) matches exact (erf-based) nn.GELU() to f32 precision.
    a1, a2, a3, a4, a5 = 0.254829592, -0.284496736, 1.421413741, -1.453152027, 1.061405429
    p = 0.3275911
    s = jnp.sign(z)
    za = jnp.abs(z)
    t = 1.0 / (1.0 + p * za)
    poly = ((((a5 * t + a4) * t + a3) * t + a2) * t + a1) * t
    return s * (1.0 - poly * jnp.exp(-za * za))


def _gelu_exact(v):
    # nn.GELU() default: 0.5 * x * (1 + erf(x / sqrt(2))).  Kept in f32 (exp -> EUP slot).
    return 0.5 * v * (1.0 + _erf(v * (1.0 / math.sqrt(2.0))))


def _layer_norm(v, w, b, eps=1e-5):
    mu = jnp.mean(v, axis=-1, keepdims=True)
    var = jnp.mean((v - mu) ** 2, axis=-1, keepdims=True)   # biased var, like F.layer_norm
    inv = lax.rsqrt(var + eps)
    return (v - mu) * inv * w + b


# ----------------------------------- kernels ---------------------------------------

def _ln_qkv_kernel(x_ref, ln1_w, ln1_b, wqkv, bqkv, qkv_ref):
    """LN1 + fused Q/K/V projection for one (batch, sequence-tile)."""
    x = x_ref[0]                                              # (TT, C) f32
    xn = _layer_norm(x, ln1_w[0], ln1_b[0])                   # f32 stats
    # One MXU matmul with N = 3C (bf16 operands, f32 accumulation).
    qkv = jnp.dot(xn.astype(jnp.bfloat16), wqkv[...],
                  preferred_element_type=jnp.float32) + bqkv[0]
    qkv_ref[0] = qkv.astype(jnp.bfloat16)


def _make_attn_kernel(seq_len, head_dim, group):
    scale = 1.0 / math.sqrt(head_dim)

    def attn_kernel(q_ref, k_ref, v_ref, y_ref):
        # Refs are (1, T, group*head_dim) bf16 slabs taken directly from the fused
        # (B,T,3C) qkv array; output goes directly into the merged (B,T,C) buffer.
        q_all = q_ref[0]                                      # (T, group*D)
        k_all = k_ref[0]
        v_all = v_ref[0]
        row = lax.broadcasted_iota(jnp.int32, (seq_len, seq_len), 0)
        col = lax.broadcasted_iota(jnp.int32, (seq_len, seq_len), 1)
        causal = col <= row
        ys = []
        for h in range(group):                                # static unroll over grouped heads
            lo = h * head_dim
            q = q_all[:, lo:lo + head_dim]
            k = k_all[:, lo:lo + head_dim]
            v = v_all[:, lo:lo + head_dim]
            # Contract head_dim of q and k directly (no explicit transpose).
            s = lax.dot_general(q, k, (((1,), (1,)), ((), ())),
                                preferred_element_type=jnp.float32) * scale
            s = jnp.where(causal, s, -1e30)                   # f32 scores -> -1e30 safe
            s = s - jnp.max(s, axis=-1, keepdims=True)
            p = jnp.exp(s)
            # Exact reciprocal (review correctness note): rows sum to 1.
            p = p * pl.reciprocal(jnp.sum(p, axis=-1, keepdims=True), approx=False)
            y = jnp.dot(p.astype(jnp.bfloat16), v, preferred_element_type=jnp.float32)
            ys.append(y.astype(jnp.bfloat16))
        # One lane-dense (T, group*D >= 128) store for the whole head group.
        y_ref[0] = jnp.concatenate(ys, axis=-1)
        # TODO(synk): flash-style KV-block loop + online softmax for long T.

    return attn_kernel


def _out_mlp_kernel(x_ref, y_ref, wo, bo, ln2_w, ln2_b, wup, bup, wdn, bdn,
                    o_ref, x1_s, xn2_s, acc):
    """Out-proj + residual + LN2 + MLP (4C streamed with accumulator) + residual."""
    k = pl.program_id(2)

    @pl.when(k == 0)
    def _():
        # Attention output projection + residual 1 + LN2, done once per (b, t) tile.
        attn = jnp.dot(y_ref[0], wo[...], preferred_element_type=jnp.float32) + bo[0]
        x1 = x_ref[0] + attn                                  # residual 1 (f32)
        x1_s[...] = x1
        xn2_s[...] = _layer_norm(x1, ln2_w[0], ln2_b[0]).astype(jnp.bfloat16)
        acc[...] = jnp.zeros_like(acc)

    # Per-chunk up-proj + GELU + down-proj; the f32 GELU chain overlaps the next
    # wdn MXU pass instead of forming one long elementwise phase.
    h = jnp.dot(xn2_s[...], wup[...], preferred_element_type=jnp.float32) + bup[0]
    g = _gelu_exact(h)
    acc[...] += jnp.dot(g.astype(jnp.bfloat16), wdn[...],
                        preferred_element_type=jnp.float32)

    @pl.when(k == pl.num_programs(2) - 1)
    def _():
        o_ref[0] = x1_s[...] + acc[...] + bdn[0]              # residual 2 (bdn added once)


# ---------------------------------- the wrapper -------------------------------------

def block_forward(x, params, num_heads, *, seq_tile=None, mlp_chunk=None):
    B, T, C = x.shape
    H = num_heads
    assert C % H == 0
    D = C // H
    p = params
    bf16 = jnp.bfloat16

    # ---- tiling choices ----
    # Sequence tile (LayerNorm / QKV / MLP are row-wise independent); 256-512 for prod.
    TT = seq_tile if seq_tile is not None else min(T, 256)
    assert T % TT == 0, "T must be divisible by the sequence tile"
    # Heads per attention grid step: keep the lane dim >= 128 (dense stores, MXU fill).
    G = max(1, 128 // D)
    while H % G:
        G -= 1
    GD = G * D
    n_groups = H // G
    # MLP hidden (4C) chunk, streamed with an f32 accumulator.
    KC = mlp_chunk if mlp_chunk is not None else min(4 * C, 512)
    assert (4 * C) % KC == 0
    NK = (4 * C) // KC

    # bf16 copies of matmul weights (f32 masters kept in `params`); biases / LN
    # parameters stay f32 (added to f32 accumulators).
    wqkv = p["wqkv"].astype(bf16)
    wo = p["wo"].astype(bf16)
    wup = p["wup"].astype(bf16)
    wdn = p["wdn"].astype(bf16)

    # Whole-array VMEM residency for constants: one copy, no per-step re-DMA and no
    # double-buffered weight windows (the "single-buffer / load once" review item).
    vmem_whole = pl.BlockSpec(memory_space=pltpu.MemorySpace.VMEM)

    def vmem_limit(nbytes):
        # Explicit scoped-VMEM limit from the actual resident set (+2x headroom),
        # clamped to the v7x 64 MiB physical ceiling.
        return int(min(max(2 * nbytes, 32 * 2**20), 64 * 2**20))

    # ---- kernel 1: LN1 + fused QKV projection, grid over (batch, seq-tile) ----
    k1_bytes = (C * 3 * C * 2 + 3 * C * 4 + 2 * C * 4             # resident weights/biases
                + 2 * (TT * C * 4 + TT * 3 * C * 2))              # double-buffered tiles
    qkv = pl.pallas_call(
        _ln_qkv_kernel,
        out_shape=jax.ShapeDtypeStruct((B, T, 3 * C), bf16),
        grid=(B, T // TT),
        in_specs=[pl.BlockSpec((1, TT, C), lambda b, t: (b, t, 0)),
                  vmem_whole, vmem_whole, vmem_whole, vmem_whole],
        out_specs=pl.BlockSpec((1, TT, 3 * C), lambda b, t: (b, t, 0)),
        compiler_params=pltpu.CompilerParams(
            dimension_semantics=("parallel", "parallel"),
            vmem_limit_bytes=vmem_limit(k1_bytes)),
    )(x, p["ln1_w"], p["ln1_b"], wqkv, p["bqkv"])

    # ---- kernel 2: causal attention, grid over (batch, head-group) ----
    # Q/K/V sliced straight out of the fused (B,T,3C) array by last-axis block index
    # (q: g, k: n_groups+g, v: 2*n_groups+g); output lands at column block g of the
    # merged (B,T,C) buffer.  No split / reshape / transpose round trips through HBM.
    q_spec = pl.BlockSpec((1, T, GD), lambda b, g: (b, 0, g))
    k_spec = pl.BlockSpec((1, T, GD), lambda b, g: (b, 0, n_groups + g))
    v_spec = pl.BlockSpec((1, T, GD), lambda b, g: (b, 0, 2 * n_groups + g))
    y_spec = pl.BlockSpec((1, T, GD), lambda b, g: (b, 0, g))
    k2_bytes = 2 * 4 * T * GD * 2 + 4 * T * T * 4
    y = pl.pallas_call(
        _make_attn_kernel(T, D, G),
        out_shape=jax.ShapeDtypeStruct((B, T, C), bf16),
        grid=(B, n_groups),
        in_specs=[q_spec, k_spec, v_spec],
        out_specs=y_spec,
        compiler_params=pltpu.CompilerParams(
            dimension_semantics=("parallel", "parallel"),
            vmem_limit_bytes=vmem_limit(k2_bytes)),
    )(qkv, qkv, qkv)

    # ---- kernel 3: out-proj + residual + LN2 + MLP (4C streamed) + residual ----
    k3_bytes = (C * C * 2 + 6 * C * 4                              # wo + biases/LN resident
                + 2 * (C * KC * 2 + KC * C * 2 + KC * 4)           # streamed wup/wdn/bup
                + 2 * (TT * C * 4 + TT * C * 2 + TT * C * 4)       # x / y / o tiles
                + TT * C * (4 + 2 + 4)                             # scratch
                + 2 * TT * KC * 4)                                 # GELU intermediates
    out = pl.pallas_call(
        _out_mlp_kernel,
        out_shape=jax.ShapeDtypeStruct((B, T, C), jnp.float32),
        grid=(B, T // TT, NK),
        in_specs=[pl.BlockSpec((1, TT, C), lambda b, t, k: (b, t, 0)),   # x (residual)
                  pl.BlockSpec((1, TT, C), lambda b, t, k: (b, t, 0)),   # merged attn heads
                  vmem_whole,                                            # wo
                  vmem_whole,                                            # bo
                  vmem_whole, vmem_whole,                                # ln2 w / b
                  pl.BlockSpec((C, KC), lambda b, t, k: (0, k)),         # wup chunk (streamed)
                  pl.BlockSpec((1, KC), lambda b, t, k: (0, k)),         # bup chunk
                  pl.BlockSpec((KC, C), lambda b, t, k: (k, 0)),         # wdn chunk (streamed)
                  vmem_whole],                                           # bdn
        out_specs=pl.BlockSpec((1, TT, C), lambda b, t, k: (b, t, 0)),
        scratch_shapes=[pltpu.VMEM((TT, C), jnp.float32),    # x1 (residual 1)
                        pltpu.VMEM((TT, C), jnp.bfloat16),   # LN2(x1)
                        pltpu.VMEM((TT, C), jnp.float32)],   # MLP accumulator
        compiler_params=pltpu.CompilerParams(
            dimension_semantics=("parallel", "parallel", "arbitrary"),
            vmem_limit_bytes=vmem_limit(k3_bytes)),
    )(x, y, wo, p["bo"], p["ln2_w"], p["ln2_b"], wup, p["bup"], wdn, p["bdn"])

    return out


# ----------------------------- pure-JAX reference (check) ---------------------------

def block_reference(x, params, num_heads):
    B, T, C = x.shape
    D = C // num_heads
    p = params

    def ln(v, w, b):
        mu = v.mean(-1, keepdims=True)
        var = ((v - mu) ** 2).mean(-1, keepdims=True)
        return (v - mu) / jnp.sqrt(var + 1e-5) * w[0] + b[0]

    xn = ln(x, p["ln1_w"], p["ln1_b"])
    qkv = xn @ p["wqkv"] + p["bqkv"][0]
    q, k, v = jnp.split(qkv, 3, axis=-1)
    q = q.reshape(B, T, num_heads, D).transpose(0, 2, 1, 3)
    k = k.reshape(B, T, num_heads, D).transpose(0, 2, 1, 3)
    v = v.reshape(B, T, num_heads, D).transpose(0, 2, 1, 3)
    s = jnp.einsum("bhqd,bhkd->bhqk", q, k) / math.sqrt(D)
    mask = jnp.tril(jnp.ones((T, T), bool))
    s = jnp.where(mask[None, None], s, -jnp.inf)
    a = jax.nn.softmax(s, axis=-1)
    y = jnp.einsum("bhqk,bhkd->bhqd", a, v).transpose(0, 2, 1, 3).reshape(B, T, C)
    x1 = x + (y @ p["wo"] + p["bo"][0])

    xn2 = ln(x1, p["ln2_w"], p["ln2_b"])
    h = xn2 @ p["wup"] + p["bup"][0]
    g = 0.5 * h * (1.0 + jax.scipy.special.erf(h / math.sqrt(2.0)))   # exact GELU
    return x1 + (g @ p["wdn"] + p["bdn"][0])


# ----------------------------------------- main ------------------------------------

def make_params(key, C):
    ks = jax.random.split(key, 12)
    f32 = jnp.float32

    def lin_w(k, fan_in, fan_out):
        # stored already transposed to (in, out) so kernels do x @ W + b
        return jax.random.normal(k, (fan_in, fan_out), f32) * 0.02

    def vec(k, n, scale=0.1):
        return jax.random.normal(k, (1, n), f32) * scale

    return {
        "ln1_w": 1.0 + vec(ks[0], C), "ln1_b": vec(ks[1], C),
        "wqkv": lin_w(ks[2], C, 3 * C), "bqkv": vec(ks[3], 3 * C),   # fused Q/K/V
        "wo": lin_w(ks[4], C, C), "bo": vec(ks[5], C),
        "ln2_w": 1.0 + vec(ks[6], C), "ln2_b": vec(ks[7], C),
        "wup": lin_w(ks[8], C, 4 * C), "bup": vec(ks[9], 4 * C),
        "wdn": lin_w(ks[10], 4 * C, C), "bdn": vec(ks[11], C),
    }


if __name__ == "__main__":
    # Small but MXU/lane-friendly config (multiples of 128/256 per review):
    # C = 256, 4 heads (head_dim 64 -> 2 heads per attention grid step = 128 lanes),
    # T = 256 with a 128-row sequence tile (2 tiles/batch), MLP hidden 1024 streamed
    # in two 512-wide chunks -> exercises the tiled/accumulator paths at toy scale.
    B, T, C, H = 2, 256, 256, 4

    key = jax.random.PRNGKey(0)
    k_x, k_p = jax.random.split(key)
    x = jax.random.normal(k_x, (B, T, C), jnp.float32)
    params = make_params(k_p, C)

    out = block_forward(x, params, num_heads=H, seq_tile=128, mlp_chunk=512)
    out = jax.block_until_ready(out)

    ref = block_reference(x, params, num_heads=H)
    # bf16 matmul operands with f32 accumulation vs an all-f32 reference.
    np.testing.assert_allclose(np.asarray(out), np.asarray(ref), rtol=2e-2, atol=2e-2)

    print("KERNEL_OK")
</pallas_src>

<mosaic_0001>
module attributes {stable_mosaic.version = 11 : i64} {
  func.func @_ln_qkv_kernel(%arg0: i32, %arg1: i32, %arg2: memref<1x128x256xf32, #tpu.memory_space<vmem>>, %arg3: memref<1x256xf32, #tpu.memory_space<vmem>>, %arg4: memref<1x256xf32, #tpu.memory_space<vmem>>, %arg5: memref<256x768xbf16, #tpu.memory_space<vmem>>, %arg6: memref<1x768xf32, #tpu.memory_space<vmem>>, %arg7: memref<1x128x768xbf16, #tpu.memory_space<vmem>>) attributes {dimension_semantics = [#tpu.dimension_semantics<parallel>, #tpu.dimension_semantics<parallel>], iteration_bounds = array<i64: 2, 2>, scalar_prefetch = 0 : i64, scratch_operands = 0 : i64, tpu.core_type = #tpu.core_type<tc>, window_params = [{transform_indices = @transform_0, window_bounds = array<i64: 1, 128, 256>}, {pipeline_mode = #tpu.pipeline_mode<synchronous>, transform_indices = @transform_1, window_bounds = array<i64: 1, 256>}, {pipeline_mode = #tpu.pipeline_mode<synchronous>, transform_indices = @transform_2, window_bounds = array<i64: 1, 256>}, {pipeline_mode = #tpu.pipeline_mode<synchronous>, transform_indices = @transform_3, window_bounds = array<i64: 256, 768>}, {pipeline_mode = #tpu.pipeline_mode<synchronous>, transform_indices = @transform_4, window_bounds = array<i64: 1, 768>}, {transform_indices = @transform_5, window_bounds = array<i64: 1, 128, 768>}]} {
    %c0 = arith.constant 0 : index
    %c0_0 = arith.constant 0 : index
    %c0_1 = arith.constant 0 : index
    %0 = vector.load %arg2[%c0, %c0_0, %c0_1] : memref<1x128x256xf32, #tpu.memory_space<vmem>>, vector<1x128x256xf32>
    %1 = vector.shape_cast %0 : vector<1x128x256xf32> to vector<128x256xf32>
    %c0_2 = arith.constant 0 : index
    %c0_3 = arith.constant 0 : index
    %2 = vector.load %arg3[%c0_2, %c0_3] : memref<1x256xf32, #tpu.memory_space<vmem>>, vector<1x256xf32>
    %3 = vector.shape_cast %2 : vector<1x256xf32> to vector<256xf32>
    %c0_4 = arith.constant 0 : index
    %c0_5 = arith.constant 0 : index
    %4 = vector.load %arg4[%c0_4, %c0_5] : memref<1x256xf32, #tpu.memory_space<vmem>>, vector<1x256xf32>
    %5 = vector.shape_cast %4 : vector<1x256xf32> to vector<256xf32>
    %cst = arith.constant dense<0.000000e+00> : vector<128xf32>
    %6 = vector.multi_reduction <add>, %1, %cst [1] : vector<128x256xf32> to vector<128xf32>
    %7 = vector.shape_cast %6 : vector<128xf32> to vector<128x1xf32>
    %cst_6 = arith.constant 2.560000e+02 : f32
    %8 = vector.broadcast %cst_6 : f32 to vector<128x1xf32>
    %9 = arith.divf %7, %8 : vector<128x1xf32>
    %10 = vector.broadcast %9 : vector<128x1xf32> to vector<128x256xf32>
    %11 = arith.subf %1, %10 : vector<128x256xf32>
    %12 = arith.mulf %11, %11 : vector<128x256xf32>
    %cst_7 = arith.constant dense<0.000000e+00> : vector<128xf32>
    %13 = vector.multi_reduction <add>, %12, %cst_7 [1] : vector<128x256xf32> to vector<128xf32>
    %14 = vector.shape_cast %13 : vector<128xf32> to vector<128x1xf32>
    %cst_8 = arith.constant 2.560000e+02 : f32
    %15 = vector.broadcast %cst_8 : f32 to vector<128x1xf32>
    %16 = arith.divf %14, %15 : vector<128x1xf32>
    %cst_9 = arith.constant 9.99999974E-6 : f32
    %17 = vector.broadcast %cst_9 : f32 to vector<128x1xf32>
    %18 = arith.addf %16, %17 : vector<128x1xf32>
    %19 = math.rsqrt %18 : vector<128x1xf32>
    %20 = vector.broadcast %9 : vector<128x1xf32> to vector<128x256xf32>
    %21 = arith.subf %1, %20 : vector<128x256xf32>
    %22 = vector.broadcast %19 : vector<128x1xf32> to vector<128x256xf32>
    %23 = arith.mulf %21, %22 : vector<128x256xf32>
    %24 = vector.shape_cast %3 : vector<256xf32> to vector<1x256xf32>
    %25 = vector.broadcast %24 : vector<1x256xf32> to vector<128x256xf32>
    %26 = arith.mulf %23, %25 : vector<128x256xf32>
    %27 = vector.shape_cast %5 : vector<256xf32> to vector<1x256xf32>
    %28 = vector.broadcast %27 : vector<1x256xf32> to vector<128x256xf32>
    %29 = arith.addf %26, %28 : vector<128x256xf32>
    %30 = arith.truncf %29 : vector<128x256xf32> to vector<128x256xbf16>
    %c0_10 = arith.constant 0 : index
    %c0_11 = arith.constant 0 : index
    %31 = vector.load %arg5[%c0_10, %c0_11] : memref<256x768xbf16, #tpu.memory_space<vmem>>, vector<256x768xbf16>
    %cst_12 = arith.constant dense<0.000000e+00> : vector<128x768xf32>
    %32 = tpu.matmul %30, %31, %cst_12 {dimension_numbers = #tpu.dot_dimension_numbers<[1], [0], [0], [1], [0, 0, 1, 1], [], []>} : vector<128x256xbf16>, vector<256x768xbf16>, vector<128x768xf32> -> vector<128x768xf32>
    %c0_13 = arith.constant 0 : index
    %c0_14 = arith.constant 0 : index
    %33 = vector.load %arg6[%c0_13, %c0_14] : memref<1x768xf32, #tpu.memory_space<vmem>>, vector<1x768xf32>
    %34 = vector.shape_cast %33 : vector<1x768xf32> to vector<768xf32>
    %35 = vector.shape_cast %34 : vector<768xf32> to vector<1x768xf32>
    %36 = vector.broadcast %35 : vector<1x768xf32> to vector<128x768xf32>
    %37 = arith.addf %32, %36 : vector<128x768xf32>
    %38 = arith.truncf %37 : vector<128x768xf32> to vector<128x768xbf16>
    %c0_15 = arith.constant 0 : index
    %c0_16 = arith.constant 0 : index
    %c0_17 = arith.constant 0 : index
    %39 = vector.load %arg7[%c0_15, %c0_16, %c0_17] : memref<1x128x768xbf16, #tpu.memory_space<vmem>>, vector<1x128x768xbf16>
    %40 = vector.shape_cast %39 : vector<1x128x768xbf16> to vector<128x768xbf16>
    %41 = vector.shape_cast %38 : vector<128x768xbf16> to vector<1x128x768xbf16>
    tpu.vector_store %arg7[%c0_15, %c0_16, %c0_17], %41 {strides = array<i32>} : memref<1x128x768xbf16, #tpu.memory_space<vmem>>, vector<1x128x768xbf16>,
    return
  }
  func.func @transform_0(%arg0: i32, %arg1: i32) -> (i32, i32, i32) {
    %c0_i32 = arith.constant 0 : i32
    %c0_i32_0 = arith.constant 0 : i32
    return %arg0, %arg1, %c0_i32 : i32, i32, i32
  }
  func.func @transform_1(%arg0: i32, %arg1: i32) -> (i32, i32) {
    %c0_i32 = arith.constant 0 : i32
    %c0_i32_0 = arith.constant 0 : i32
    %c0_i32_1 = arith.constant 0 : i32
    return %c0_i32, %c0_i32_0 : i32, i32
  }
  func.func @transform_2(%arg0: i32, %arg1: i32) -> (i32, i32) {
    %c0_i32 = arith.constant 0 : i32
    %c0_i32_0 = arith.constant 0 : i32
    %c0_i32_1 = arith.constant 0 : i32
    return %c0_i32, %c0_i32_0 : i32, i32
  }
  func.func @transform_3(%arg0: i32, %arg1: i32) -> (i32, i32) {
    %c0_i32 = arith.constant 0 : i32
    %c0_i32_0 = arith.constant 0 : i32
    %c0_i32_1 = arith.constant 0 : i32
    return %c0_i32, %c0_i32_0 : i32, i32
  }
  func.func @transform_4(%arg0: i32, %arg1: i32) -> (i32, i32) {
    %c0_i32 = arith.constant 0 : i32
    %c0_i32_0 = arith.constant 0 : i32
    %c0_i32_1 = arith.constant 0 : i32
    return %c0_i32, %c0_i32_0 : i32, i32
  }
  func.func @transform_5(%arg0: i32, %arg1: i32) -> (i32, i32, i32) {
    %c0_i32 = arith.constant 0 : i32
    %c0_i32_0 = arith.constant 0 : i32
    return %arg0, %arg1, %c0_i32 : i32, i32, i32
  }
}

</mosaic_0001>

<llo_original>
// kernel: tpu_custom_call.1
$region0: #{tpu_custom_call.1}
  #allocation0 [shape = 'u32[]', space=smem, size = 0x4, offset = 0x4, fixed_abs, tag = 'smem constant byte address 0x4 - core index']
  #allocation1 [shape = 'u32[144,128]{1,0:T(1,128)}', space=vmem, size = 0x12000, scoped, tag = 'internal scratch']
  %s0 = inlined_call_operand.hbm [shape: f32[2,256,256], index: 0, kind: input, shape index: {}]
  %s1 = inlined_call_operand.hbm [shape: f32[1,256], index: 1, kind: input, shape index: {}]
  %s2 = inlined_call_operand.hbm [shape: f32[1,256], index: 2, kind: input, shape index: {}]
  %s3 = inlined_call_operand.hbm [shape: bf16[256,768], index: 3, kind: input, shape index: {}]
  %s4 = inlined_call_operand.vmem [shape: f32[1,768], index: 4, kind: input, shape index: {}]
  %s5 = inlined_call_operand.hbm [shape: bf16[2,256,768], index: 5, kind: output, shape index: {}]
  %s6 = sld [smem:[#allocation0]]
  $region69: #{tpu_custom_call.1} parent=0
    _
  %s8 = ssub.s32 1, %s6
  %s9 = scalar_select 0, %s8, %s6
  $region1: #{tpu_custom_call.1} parent=0
    #allocation2 [shape = 'u8[262144]{0}', space=vmem, size = 0x40000, scoped, tag = 'input window, operand 0']
    #allocation3 [shape = 's32[2]{0}', space=sflag, size = 0x8, scoped, tag = 'scoped memory for tpu_custom_call.1']
    #allocation4 [shape = 's32[2]{0}', space=sflag, size = 0x8, scoped, tag = 'scoped memory for tpu_custom_call.1']
    #allocation5 [shape = 'u8[1024]{0}', space=vmem, size = 0x400, scoped, tag = 'input window, operand 1, single buffered']
    #allocation6 [shape = 's32[1]{0}', space=sflag, size = 0x4, scoped, tag = 'scoped memory for tpu_custom_call.1']
    #allocation7 [shape = 'u8[1024]{0}', space=vmem, size = 0x400, scoped, tag = 'input window, operand 2, single buffered']
    #allocation8 [shape = 'u8[393216]{0}', space=vmem, size = 0x60000, scoped, tag = 'input window, operand 3, single buffered']
    #allocation9 [shape = 's32[1]{0}', space=sflag, size = 0x4, scoped, tag = 'scoped memory for tpu_custom_call.1']
    #allocation10 [shape = 'u8[393216]{0}', space=vmem, size = 0x60000, scoped, tag = 'output window, operand 0']
    %10 = vsyncpa [#allocation3], 0
    %s11 = scalar_lea.sflag [#allocation3], 1
    %12 = vsyncpa %s11, 0
    %13 = vsyncpa [#allocation6], 0
    %14 = vsyncpa [#allocation9], 0
    %15 = vsyncpa [#allocation4], 0
    %s16 = scalar_lea.sflag [#allocation4], 1
    %17 = vsyncpa %s16, 0
    loop: start=0, step=1, limit=6
    $region2: #{tpu_custom_call.1} parent=1 // loop_pre_header
      _
    $region3: #{tpu_custom_call.1} parent=1 // loop_header
      %s19 = sphi 0, %s23
      %p20 = scmp.ge.s32.totalorder %s19, 6
      %s26 = sphi 0, %s38
      %s27 = sphi 0, %s34
      %s28 = sphi 0, %s26
      %s29 = sphi 0, %s27
      %s30 = sphi 0, %s28
      %s31 = sphi 0, %s29
      %s43 = sphi 0, %s45
      %s46 = sphi 0, %s43
      %s47 = sphi 0, %s46
      %s63 = sphi 0, %s47
      %s67 = sphi 0, %s67
      %s69 = sphi 0, %s67
      %s70 = sphi 0, %s69
      %s84 = sphi 0, %s70
      %s88 = sphi 0, %s88
      %s90 = sphi 0, %s88
      %s91 = sphi 0, %s90
      %s105 = sphi 0, %s91
      %s109 = sphi 0, %s109
      %s111 = sphi 0, %s109
      %s112 = sphi 0, %s111
      %s126 = sphi 0, %s112
      %s130 = sphi 0, %s130
      %s132 = sphi 0, %s130
      %s133 = sphi 0, %s132
      %s147 = sphi 0, %s133
      %s155 = sphi 0, %s157
      %s158 = sphi 0, %s155
      %s159 = sphi 0, %s158
      %s175 = sphi 0, %s159
    $region4: #{tpu_custom_call.1} parent=1 // loop_header_branch
      %22 = sbr.rel (%p20) target = $region8
    $region5: #{tpu_custom_call.1} parent=1 // loop_body
      %s24 = ssub.s32 %s19, 1
      %s25 = ssub.s32 %s19, 2
      %s32 = sadd.s32 1, %s27
      %p33 = scmp.ge.s32.totalorder %s32, 2
      %s34 = scalar_select %p33, 0, %s32
      %s35 = sadd.s32 1, %s26
      %s36 = scalar_select %p33, %s35, %s26
      %p37 = scmp.ge.s32.totalorder %s36, 2
      %s38 = scalar_select %p37, 0, %s36
      %s39 = ssub.s32 %s26, %s38
      %s40 = ssub.s32 %s27, %s34
      %s41 = sor.u32 %s39, %s40
      %p42 = scmp.eq.s32.totalorder %s41, 0
      %s44 = sadd.s32 %s43, 1
      %s45 = scalar_select %p42, %s43, %s44
      %p48 = pneg %p42
      %p49 = scmp.eq.s32.totalorder %s19, 3
      %p50 = por %p48, %p49
      %p51 = scmp.ne.s32.totalorder %s43, %s46
      %p52 = scmp.eq.s32.totalorder %s19, 0
      %p53 = por %p51, %p52
      %p54 = scmp.ne.s32.totalorder %s43, %s46
      %p55 = scmp.eq.s32.totalorder %s24, 3
      %p56 = por %p54, %p55
      %p57 = scmp.ne.s32.totalorder %s46, %s47
      %p58 = scmp.eq.s32.totalorder %s24, 0
      %p59 = por %p57, %p58
      %p60 = scmp.ne.s32.totalorder %s46, %s47
      %p61 = scmp.eq.s32.totalorder %s25, 3
      %p62 = por %p60, %p61
      %p64 = scmp.ne.s32.totalorder %s47, %s63
      %p65 = scmp.eq.s32.totalorder %s25, 0
      %p66 = por %p64, %p65
      %s68 = sadd.s32 %s67, 1
      %p71 = scmp.eq.s32.totalorder %s19, 3
      %p72 = scmp.ne.s32.totalorder %s67, %s69
      %p73 = scmp.eq.s32.totalorder %s19, 0
      %p74 = por %p72, %p73
      %p75 = scmp.ne.s32.totalorder %s67, %s69
      %p76 = scmp.eq.s32.totalorder %s24, 3
      %p77 = por %p75, %p76
      %p78 = scmp.ne.s32.totalorder %s69, %s70
      %p79 = scmp.eq.s32.totalorder %s24, 0
      %p80 = por %p78, %p79
      %p81 = scmp.ne.s32.totalorder %s69, %s70
      %p82 = scmp.eq.s32.totalorder %s25, 3
      %p83 = por %p81, %p82
      %p85 = scmp.ne.s32.totalorder %s70, %s84
      %p86 = scmp.eq.s32.totalorder %s25, 0
      %p87 = por %p85, %p86
      %s89 = sadd.s32 %s88, 1
      %p92 = scmp.eq.s32.totalorder %s19, 3
      %p93 = scmp.ne.s32.totalorder %s88, %s90
      %p94 = scmp.eq.s32.totalorder %s19, 0
      %p95 = por %p93, %p94
      %p96 = scmp.ne.s32.totalorder %s88, %s90
      %p97 = scmp.eq.s32.totalorder %s24, 3
      %p98 = por %p96, %p97
      %p99 = scmp.ne.s32.totalorder %s90, %s91
      %p100 = scmp.eq.s32.totalorder %s24, 0
      %p101 = por %p99, %p100
      %p102 = scmp.ne.s32.totalorder %s90, %s91
      %p103 = scmp.eq.s32.totalorder %s25, 3
      %p104 = por %p102, %p103
      %p106 = scmp.ne.s32.totalorder %s91, %s105
      %p107 = scmp.eq.s32.totalorder %s25, 0
      %p108 = por %p106, %p107
      %s110 = sadd.s32 %s109, 1
      %p113 = scmp.eq.s32.totalorder %s19, 3
      %p114 = scmp.ne.s32.totalorder %s109, %s111
      %p115 = scmp.eq.s32.totalorder %s19, 0
      %p116 = por %p114, %p115
      %p117 = scmp.ne.s32.totalorder %s109, %s111
      %p118 = scmp.eq.s32.totalorder %s24, 3
      %p119 = por %p117, %p118
      %p120 = scmp.ne.s32.totalorder %s111, %s112
      %p121 = scmp.eq.s32.totalorder %s24, 0
      %p122 = por %p120, %p121
      %p123 = scmp.ne.s32.totalorder %s111, %s112
      %p124 = scmp.eq.s32.totalorder %s25, 3
      %p125 = por %p123, %p124
      %p127 = scmp.ne.s32.totalorder %s112, %s126
      %p128 = scmp.eq.s32.totalorder %s25, 0
      %p129 = por %p127, %p128
      %s131 = sadd.s32 %s130, 1
      %p134 = scmp.eq.s32.totalorder %s19, 3
      %p135 = scmp.ne.s32.totalorder %s130, %s132
      %p136 = scmp.eq.s32.totalorder %s19, 0
      %p137 = por %p135, %p136
      %p138 = scmp.ne.s32.totalorder %s130, %s132
      %p139 = scmp.eq.s32.totalorder %s24, 3
      %p140 = por %p138, %p139
      %p141 = scmp.ne.s32.totalorder %s132, %s133
      %p142 = scmp.eq.s32.totalorder %s24, 0
      %p143 = por %p141, %p142
      %p144 = scmp.ne.s32.totalorder %s132, %s133
      %p145 = scmp.eq.s32.totalorder %s25, 3
      %p146 = por %p144, %p145
      %p148 = scmp.ne.s32.totalorder %s133, %s147
      %p149 = scmp.eq.s32.totalorder %s25, 0
      %p150 = por %p148, %p149
      %s151 = ssub.s32 %s26, %s38
      %s152 = ssub.s32 %s27, %s34
      %s153 = sor.u32 %s151, %s152
      %p154 = scmp.eq.s32.totalorder %s153, 0
      %s156 = sadd.s32 %s155, 1
      %s157 = scalar_select %p154, %s155, %s156
      %p160 = pneg %p154
      %p161 = scmp.eq.s32.totalorder %s19, 3
      %p162 = por %p160, %p161
      %p163 = scmp.ne.s32.totalorder %s155, %s158
      %p164 = scmp.eq.s32.totalorder %s19, 0
      %p165 = por %p163, %p164
      %p166 = scmp.ne.s32.totalorder %s155, %s158
      %p167 = scmp.eq.s32.totalorder %s24, 3
      %p168 = por %p166, %p167
      %p169 = scmp.ne.s32.totalorder %s158, %s159
      %p170 = scmp.eq.s32.totalorder %s24, 0
      %p171 = por %p169, %p170
      %p172 = scmp.ne.s32.totalorder %s158, %s159
      %p173 = scmp.eq.s32.totalorder %s25, 3
      %p174 = por %p172, %p173
      %p176 = scmp.ne.s32.totalorder %s159, %s175
      %p177 = scmp.eq.s32.totalorder %s25, 0
      %p178 = por %p176, %p177
      %p179 = scmp.le.s32.totalorder 1, %s19
      %p180 = scmp.lt.s32.totalorder %s19, 5
      %p181 = pnand %p179, %p180
      %p182 = pneg %p181
      // Predicated region
      $region9: #{tpu_custom_call.1} parent=5 // pred_check
        _
      $region10: #{tpu_custom_call.1} parent=5 // pred_check_branch
        %184 = sbr.rel (%p181) target = $region12
      $region11: #{tpu_custom_call.1} parent=5 // pred_region
        %s185 = ssub.s32 %s19, 1
        // Predicated region
        $region13: #{tpu_custom_call.1} parent=11 // pred_check
          %p186 = pneg %p80
        $region14: #{tpu_custom_call.1} parent=11 // pred_check_branch
          %188 = sbr.rel (%p186) target = $region16
        $region15: #{tpu_custom_call.1} parent=11 // pred_region
          %s190 = ssub.s32 32, 32
          %191 = vsyncadd [#allocation6], %s190
          %s193 = sshll.u32 [#allocation5], 4
          %s194 = int_to_ptr.vmem [resolvable:$true] %s193
          %196 = dma.hbm_to_vmem [thread:$0]  %s1, 32, %s194, [#allocation6]
        $region16: #{tpu_custom_call.1} parent=11 // pred_fallthru
          _
        // Predicated region
        $region17: #{tpu_custom_call.1} parent=11 // pred_check
          %p197 = pneg %p101
        $region18: #{tpu_custom_call.1} parent=11 // pred_check_branch
          %199 = sbr.rel (%p197) target = $region20
        $region19: #{tpu_custom_call.1} parent=11 // pred_region
          %s201 = ssub.s32 32, 32
          %202 = vsyncadd [#allocation6], %s201
          %s204 = sshll.u32 [#allocation7], 4
          %s205 = int_to_ptr.vmem [resolvable:$true] %s204
          %207 = dma.hbm_to_vmem [thread:$0]  %s2, 32, %s205, [#allocation6]
        $region20: #{tpu_custom_call.1} parent=11 // pred_fallthru
          _
        // Predicated region
        $region21: #{tpu_custom_call.1} parent=11 // pred_check
          %p208 = pneg %p122
        $region22: #{tpu_custom_call.1} parent=11 // pred_check_branch
          %210 = sbr.rel (%p208) target = $region24
        $region23: #{tpu_custom_call.1} parent=11 // pred_region
          %s212 = ssub.s32 12288, 12288
          %213 = vsyncadd [#allocation9], %s212
          %s214 = sshll.u32 [#allocation8], 4
          %s215 = int_to_ptr.vmem [resolvable:$true] %s214
          %220 = dma.hbm_to_vmem [thread:$0]  %s3, 12288, %s215, [#allocation9], 384, 384, 24
        $region24: #{tpu_custom_call.1} parent=11 // pred_fallthru
          _
        // Predicated region
        $region25: #{tpu_custom_call.1} parent=11 // pred_check
          %p221 = pneg %p143
        $region26: #{tpu_custom_call.1} parent=11 // pred_check_branch
          %223 = sbr.rel (%p221) target = $region28
        $region27: #{tpu_custom_call.1} parent=11 // pred_region
          _
        $region28: #{tpu_custom_call.1} parent=11 // pred_fallthru
          _
      $region12: #{tpu_custom_call.1} parent=5 // pred_fallthru
        _
      %p224 = scmp.lt.s32.totalorder %s19, 4
      // Predicated region
      $region29: #{tpu_custom_call.1} parent=5 // pred_check
        %p225 = pneg %p224
      $region30: #{tpu_custom_call.1} parent=5 // pred_check_branch
        %227 = sbr.rel (%p225) target = $region32
      $region31: #{tpu_custom_call.1} parent=5 // pred_region
        // Predicated region
        $region33: #{tpu_custom_call.1} parent=31 // pred_check
          %p228 = pneg %p53
        $region34: #{tpu_custom_call.1} parent=31 // pred_check_branch
          %230 = sbr.rel (%p228) target = $region36
        $region35: #{tpu_custom_call.1} parent=31 // pred_region
          %s231 = sand.u32 %s43, 1
          %s232 = scalar_lea.sflag [#allocation3], %s231
          %s233 = sand.u32 %s43, 1
          %s234 = smul.addr %s233, 256
          %s235 = scalar_lea.vmem [#allocation2], %s234
          %s236 = smul.u32 16, %s27
          %s238 = ssub.s32 4096, 4096
          %239 = vsyncadd %s232, %s238
          %s240 = smul.addr %s236, 2
          %s241 = smul.addr %s26, 64
          %s242 = sadd.s32 %s240, %s241
          %s243 = smul.addr %s242, 128
          %s244 = scalar_lea.hbm %s0, %s243
          %s245 = sshll.u32 %s235, 4
          %s246 = int_to_ptr.vmem [resolvable:$true] %s245
          %251 = dma.hbm_to_vmem [thread:$0]  %s244, 4096, %s246, %s232, 256, 256, 16
        $region36: #{tpu_custom_call.1} parent=31 // pred_fallthru
          _
      $region32: #{tpu_custom_call.1} parent=5 // pred_fallthru
        _
      %p252 = scmp.le.s32.totalorder 1, %s19
      %p253 = scmp.lt.s32.totalorder %s19, 5
      %p254 = pnand %p252, %p253
      %p255 = pneg %p254
      // Predicated region
      $region37: #{tpu_custom_call.1} parent=5 // pred_check
        _
      $region38: #{tpu_custom_call.1} parent=5 // pred_check_branch
        %257 = sbr.rel (%p254) target = $region40
      $region39: #{tpu_custom_call.1} parent=5 // pred_region
        %s258 = ssub.s32 %s19, 1
        %s259 = sand.u32 %s46, 1
        %s260 = scalar_lea.sflag [#allocation3], %s259
        %s261 = sand.u32 %s46, 1
        %s262 = smul.addr %s261, 256
        %s263 = scalar_lea.vmem [#allocation2], %s262
        // Predicated region
        $region41: #{tpu_custom_call.1} parent=39 // pred_check
          %p264 = pneg %p59
        $region42: #{tpu_custom_call.1} parent=39 // pred_check_branch
          %266 = sbr.rel (%p264) target = $region44
        $region43: #{tpu_custom_call.1} parent=39 // pred_region
          %267 = dma.done %s260, 4096
        $region44: #{tpu_custom_call.1} parent=39 // pred_fallthru
          _
        // Predicated region
        $region45: #{tpu_custom_call.1} parent=39 // pred_check
          %p268 = pneg %p80
        $region46: #{tpu_custom_call.1} parent=39 // pred_check_branch
          %270 = sbr.rel (%p268) target = $region48
        $region47: #{tpu_custom_call.1} parent=39 // pred_region
          %271 = dma.done [#allocation6], 32
        $region48: #{tpu_custom_call.1} parent=39 // pred_fallthru
          _
        // Predicated region
        $region49: #{tpu_custom_call.1} parent=39 // pred_check
          %p272 = pneg %p101
        $region50: #{tpu_custom_call.1} parent=39 // pred_check_branch
          %274 = sbr.rel (%p272) target = $region52
        $region51: #{tpu_custom_call.1} parent=39 // pred_region
          %275 = dma.done [#allocation6], 32
        $region52: #{tpu_custom_call.1} parent=39 // pred_fallthru
          _
        // Predicated region
        $region53: #{tpu_custom_call.1} parent=39 // pred_check
          %p276 = pneg %p122
        $region54: #{tpu_custom_call.1} parent=39 // pred_check_branch
          %278 = sbr.rel (%p276) target = $region56
        $region55: #{tpu_custom_call.1} parent=39 // pred_region
          %279 = dma.done [#allocation9], 12288
        $region56: #{tpu_custom_call.1} parent=39 // pred_fallthru
          _
        %s280 = sand.u32 %s46, 1
        %s281 = scalar_lea.sflag [#allocation3], %s280
        %s282 = sand.u32 %s46, 1
        %s283 = smul.addr %s282, 256
        %s284 = scalar_lea.vmem [#allocation2], %s283
        %p285 = pneg %p59
        %p286 = pneg %p56
        %p287 = pneg %p80
        %p288 = pneg %p77
        %p289 = pneg %p101
        %p290 = pneg %p98
        %p291 = pneg %p122
        %p292 = pneg %p119
        %p293 = pneg %p143
        %p294 = pneg %p140
        %p295 = pneg %p171
        %p296 = pneg %p168
        %s297 = sand.u32 %s158, 1
        %s298 = scalar_lea.sflag [#allocation4], %s297
        %s299 = sand.u32 %s158, 1
        %s300 = smul.addr %s299, 384
        %s301 = scalar_lea.vmem [#allocation10], %s300
        %s302 = smul.u32 16, %s29
        %s303 = smul.u32 16, %s29
        %v304 = vld [vmem:[%s263] sm:$0xff]
        %v305 = vld [vmem:[%s263 + $0x8] sm:$0xff]
        %v306 = vld [vmem:[%s263 + $0x10] sm:$0xff]
        %v307 = vld [vmem:[%s263 + $0x18] sm:$0xff]
        %v308 = vld [vmem:[%s263 + $0x20] sm:$0xff]
        %v309 = vld [vmem:[%s263 + $0x28] sm:$0xff]
        %v310 = vld [vmem:[%s263 + $0x30] sm:$0xff]
        %v311 = vld [vmem:[%s263 + $0x38] sm:$0xff]
        %v312 = vld [vmem:[%s263 + $0x40] sm:$0xff]
        %v313 = vld [vmem:[%s263 + $0x48] sm:$0xff]
        %v314 = vld [vmem:[%s263 + $0x50] sm:$0xff]
        %v315 = vld [vmem:[%s263 + $0x58] sm:$0xff]
        %v316 = vld [vmem:[%s263 + $0x60] sm:$0xff]
        %v317 = vld [vmem:[%s263 + $0x68] sm:$0xff]
        %v318 = vld [vmem:[%s263 + $0x70] sm:$0xff]
        %v319 = vld [vmem:[%s263 + $0x78] sm:$0xff]
        %v320 = vld [vmem:[%s263 + $0x80] sm:$0xff]
        %v321 = vld [vmem:[%s263 + $0x88] sm:$0xff]
        %v322 = vld [vmem:[%s263 + $0x90] sm:$0xff]
        %v323 = vld [vmem:[%s263 + $0x98] sm:$0xff]
        %v324 = vld [vmem:[%s263 + $0xa0] sm:$0xff]
        %v325 = vld [vmem:[%s263 + $0xa8] sm:$0xff]
        %v326 = vld [vmem:[%s263 + $0xb0] sm:$0xff]
        %v327 = vld [vmem:[%s263 + $0xb8] sm:$0xff]
        %v328 = vld [vmem:[%s263 + $0xc0] sm:$0xff]
        %v329 = vld [vmem:[%s263 + $0xc8] sm:$0xff]
        %v330 = vld [vmem:[%s263 + $0xd0] sm:$0xff]
        %v331 = vld [vmem:[%s263 + $0xd8] sm:$0xff]
        %v332 = vld [vmem:[%s263 + $0xe0] sm:$0xff]
        %v333 = vld [vmem:[%s263 + $0xe8] sm:$0xff]
        %v334 = vld [vmem:[%s263 + $0xf0] sm:$0xff]
        %v335 = vld [vmem:[%s263 + $0xf8] sm:$0xff]
        %v336 = vld [vmem:[#allocation5] sm:$0x3]
        %v337 = vld [vmem:[#allocation7] sm:$0x3]
        %v338 = vadd.f32 %v304, %v305
        %339 = vadd.xlane.f32.xlu0 %v338
        %v340 = vpop.xlane.xlu0 %339
        %v341 = vadd.f32 %v306, %v307
        %342 = vadd.xlane.f32.xlu0 %v341
        %v343 = vpop.xlane.xlu0 %342
        %v344 = vadd.f32 %v308, %v309
        %345 = vadd.xlane.f32.xlu0 %v344
        %v346 = vpop.xlane.xlu0 %345
        %v347 = vadd.f32 %v310, %v311
        %348 = vadd.xlane.f32.xlu0 %v347
        %v349 = vpop.xlane.xlu0 %348
        %v350 = vadd.f32 %v312, %v313
        %351 = vadd.xlane.f32.xlu0 %v350
        %v352 = vpop.xlane.xlu0 %351
        %v353 = vadd.f32 %v314, %v315
        %354 = vadd.xlane.f32.xlu0 %v353
        %v355 = vpop.xlane.xlu0 %354
        %v356 = vadd.f32 %v316, %v317
        %357 = vadd.xlane.f32.xlu0 %v356
        %v358 = vpop.xlane.xlu0 %357
        %v359 = vadd.f32 %v318, %v319
        %360 = vadd.xlane.f32.xlu0 %v359
        %v361 = vpop.xlane.xlu0 %360
        %v362 = vadd.f32 %v320, %v321
        %363 = vadd.xlane.f32.xlu0 %v362
        %v364 = vpop.xlane.xlu0 %363
        %v365 = vadd.f32 %v322, %v323
        %366 = vadd.xlane.f32.xlu0 %v365
        %v367 = vpop.xlane.xlu0 %366
        %v368 = vadd.f32 %v324, %v325
        %369 = vadd.xlane.f32.xlu0 %v368
        %v370 = vpop.xlane.xlu0 %369
        %v371 = vadd.f32 %v326, %v327
        %372 = vadd.xlane.f32.xlu0 %v371
        %v373 = vpop.xlane.xlu0 %372
        %v374 = vadd.f32 %v328, %v329
        %375 = vadd.xlane.f32.xlu0 %v374
        %v376 = vpop.xlane.xlu0 %375
        %v377 = vadd.f32 %v330, %v331
        %378 = vadd.xlane.f32.xlu0 %v377
        %v379 = vpop.xlane.xlu0 %378
        %v380 = vadd.f32 %v332, %v333
        %381 = vadd.xlane.f32.xlu0 %v380
        %v382 = vpop.xlane.xlu0 %381
        %v383 = vadd.f32 %v334, %v335
        %384 = vadd.xlane.f32.xlu0 %v383
        %v385 = vpop.xlane.xlu0 %384
        %v386 = vrcp.pop 256.0
        %v387 = vmul.f32 %v340, %v386
        %v388 = vmul.f32 %v343, %v386
        %v389 = vmul.f32 %v346, %v386
        %v390 = vmul.f32 %v349, %v386
        %v391 = vmul.f32 %v352, %v386
        %v392 = vmul.f32 %v355, %v386
        %v393 = vmul.f32 %v358, %v386
        %v394 = vmul.f32 %v361, %v386
        %v395 = vmul.f32 %v364, %v386
        %v396 = vmul.f32 %v367, %v386
        %v397 = vmul.f32 %v370, %v386
        %v398 = vmul.f32 %v373, %v386
        %v399 = vmul.f32 %v376, %v386
        %v400 = vmul.f32 %v379, %v386
        %v401 = vmul.f32 %v382, %v386
        %v402 = vmul.f32 %v385, %v386
        %v403 = vsub.f32 %v304, %v387
        %v404 = vsub.f32 %v305, %v387
        %v405 = vsub.f32 %v306, %v388
        %v406 = vsub.f32 %v307, %v388
        %v407 = vsub.f32 %v308, %v389
        %v408 = vsub.f32 %v309, %v389
        %v409 = vsub.f32 %v310, %v390
        %v410 = vsub.f32 %v311, %v390
        %v411 = vsub.f32 %v312, %v391
        %v412 = vsub.f32 %v313, %v391
        %v413 = vsub.f32 %v314, %v392
        %v414 = vsub.f32 %v315, %v392
        %v415 = vsub.f32 %v316, %v393
        %v416 = vsub.f32 %v317, %v393
        %v417 = vsub.f32 %v318, %v394
        %v418 = vsub.f32 %v319, %v394
        %v419 = vsub.f32 %v320, %v395
        %v420 = vsub.f32 %v321, %v395
        %v421 = vsub.f32 %v322, %v396
        %v422 = vsub.f32 %v323, %v396
        %v423 = vsub.f32 %v324, %v397
        %v424 = vsub.f32 %v325, %v397
        %v425 = vsub.f32 %v326, %v398
        %v426 = vsub.f32 %v327, %v398
        %v427 = vsub.f32 %v328, %v399
        %v428 = vsub.f32 %v329, %v399
        %v429 = vsub.f32 %v330, %v400
        %v430 = vsub.f32 %v331, %v400
        %v431 = vsub.f32 %v332, %v401
        %v432 = vsub.f32 %v333, %v401
        %v433 = vsub.f32 %v334, %v402
        %v434 = vsub.f32 %v335, %v402
        %v435 = vmul.f32 %v403, %v403
        %v436 = vmul.f32 %v404, %v404
        %v437 = vmul.f32 %v405, %v405
        %v438 = vmul.f32 %v406, %v406
        %v439 = vmul.f32 %v407, %v407
        %v440 = vmul.f32 %v408, %v408
        %v441 = vmul.f32 %v409, %v409
        %v442 = vmul.f32 %v410, %v410
        %v443 = vmul.f32 %v411, %v411
        %v444 = vmul.f32 %v412, %v412
        %v445 = vmul.f32 %v413, %v413
        %v446 = vmul.f32 %v414, %v414
        %v447 = vmul.f32 %v415, %v415
        %v448 = vmul.f32 %v416, %v416
        %v449 = vmul.f32 %v417, %v417
        %v450 = vmul.f32 %v418, %v418
        %v451 = vmul.f32 %v419, %v419
        %v452 = vmul.f32 %v420, %v420
        %v453 = vmul.f32 %v421, %v421
        %v454 = vmul.f32 %v422, %v422
        %v455 = vmul.f32 %v423, %v423
        %v456 = vmul.f32 %v424, %v424
        %v457 = vmul.f32 %v425, %v425
        %v458 = vmul.f32 %v426, %v426
        %v459 = vmul.f32 %v427, %v427
        %v460 = vmul.f32 %v428, %v428
        %v461 = vmul.f32 %v429, %v429
        %v462 = vmul.f32 %v430, %v430
        %v463 = vmul.f32 %v431, %v431
        %v464 = vmul.f32 %v432, %v432
        %v465 = vmul.f32 %v433, %v433
        %v466 = vmul.f32 %v434, %v434
        %v467 = vadd.f32 %v435, %v436
        %468 = vadd.xlane.f32.xlu0 %v467
        %v469 = vpop.xlane.xlu0 %468
        %v470 = vadd.f32 %v437, %v438
        %471 = vadd.xlane.f32.xlu0 %v470
        %v472 = vpop.xlane.xlu0 %471
        %v473 = vadd.f32 %v439, %v440
        %474 = vadd.xlane.f32.xlu0 %v473
        %v475 = vpop.xlane.xlu0 %474
        %v476 = vadd.f32 %v441, %v442
        %477 = vadd.xlane.f32.xlu0 %v476
        %v478 = vpop.xlane.xlu0 %477
        %v479 = vadd.f32 %v443, %v444
        %480 = vadd.xlane.f32.xlu0 %v479
        %v481 = vpop.xlane.xlu0 %480
        %v482 = vadd.f32 %v445, %v446
        %483 = vadd.xlane.f32.xlu0 %v482
        %v484 = vpop.xlane.xlu0 %483
        %v485 = vadd.f32 %v447, %v448
        %486 = vadd.xlane.f32.xlu0 %v485
        %v487 = vpop.xlane.xlu0 %486
        %v488 = vadd.f32 %v449, %v450
        %489 = vadd.xlane.f32.xlu0 %v488
        %v490 = vpop.xlane.xlu0 %489
        %v491 = vadd.f32 %v451, %v452
        %492 = vadd.xlane.f32.xlu0 %v491
        %v493 = vpop.xlane.xlu0 %492
        %v494 = vadd.f32 %v453, %v454
        %495 = vadd.xlane.f32.xlu0 %v494
        %v496 = vpop.xlane.xlu0 %495
        %v497 = vadd.f32 %v455, %v456
        %498 = vadd.xlane.f32.xlu0 %v497
        %v499 = vpop.xlane.xlu0 %498
        %v500 = vadd.f32 %v457, %v458
        %501 = vadd.xlane.f32.xlu0 %v500
        %v502 = vpop.xlane.xlu0 %501
        %v503 = vadd.f32 %v459, %v460
        %504 = vadd.xlane.f32.xlu0 %v503
        %v505 = vpop.xlane.xlu0 %504
        %v506 = vadd.f32 %v461, %v462
        %507 = vadd.xlane.f32.xlu0 %v506
        %v508 = vpop.xlane.xlu0 %507
        %v509 = vadd.f32 %v463, %v464
        %510 = vadd.xlane.f32.xlu0 %v509
        %v511 = vpop.xlane.xlu0 %510
        %v512 = vadd.f32 %v465, %v466
        %513 = vadd.xlane.f32.xlu0 %v512
        %v514 = vpop.xlane.xlu0 %513
        %v515 = vmul.f32 %v469, %v386
        %v516 = vmul.f32 %v472, %v386
        %v517 = vmul.f32 %v475, %v386
        %v518 = vmul.f32 %v478, %v386
        %v519 = vmul.f32 %v481, %v386
        %v520 = vmul.f32 %v484, %v386
        %v521 = vmul.f32 %v487, %v386
        %v522 = vmul.f32 %v490, %v386
        %v523 = vmul.f32 %v493, %v386
        %v524 = vmul.f32 %v496, %v386
        %v525 = vmul.f32 %v499, %v386
        %v526 = vmul.f32 %v502, %v386
        %v527 = vmul.f32 %v505, %v386
        %v528 = vmul.f32 %v508, %v386
        %v529 = vmul.f32 %v511, %v386
        %v530 = vmul.f32 %v514, %v386
        %v531 = vadd.f32 %v515, 1e-05
        %v532 = vadd.f32 %v516, 1e-05
        %v533 = vadd.f32 %v517, 1e-05
        %v534 = vadd.f32 %v518, 1e-05
        %v535 = vadd.f32 %v519, 1e-05
        %v536 = vadd.f32 %v520, 1e-05
        %v537 = vadd.f32 %v521, 1e-05
        %v538 = vadd.f32 %v522, 1e-05
        %v539 = vadd.f32 %v523, 1e-05
        %v540 = vadd.f32 %v524, 1e-05
        %v541 = vadd.f32 %v525, 1e-05
        %v542 = vadd.f32 %v526, 1e-05
        %v543 = vadd.f32 %v527, 1e-05
        %v544 = vadd.f32 %v528, 1e-05
        %v545 = vadd.f32 %v529, 1e-05
        %v546 = vadd.f32 %v530, 1e-05
        %v547 = vrsqrt.pop %v531
        %v548 = vrsqrt.pop %v532
        %v549 = vrsqrt.pop %v533
        %v550 = vrsqrt.pop %v534
        %v551 = vrsqrt.pop %v535
        %v552 = vrsqrt.pop %v536
        %v553 = vrsqrt.pop %v537
        %v554 = vrsqrt.pop %v538
        %v555 = vrsqrt.pop %v539
        %v556 = vrsqrt.pop %v540
        %v557 = vrsqrt.pop %v541
        %v558 = vrsqrt.pop %v542
        %v559 = vrsqrt.pop %v543
        %v560 = vrsqrt.pop %v544
        %v561 = vrsqrt.pop %v545
        %v562 = vrsqrt.pop %v546
        %v563 = vmul.f32 %v403, %v547
        %v564 = vmul.f32 %v404, %v547
        %v565 = vmul.f32 %v405, %v548
        %v566 = vmul.f32 %v406, %v548
        %v567 = vmul.f32 %v407, %v549
        %v568 = vmul.f32 %v408, %v549
        %v569 = vmul.f32 %v409, %v550
        %v570 = vmul.f32 %v410, %v550
        %v571 = vmul.f32 %v411, %v551
        %v572 = vmul.f32 %v412, %v551
        %v573 = vmul.f32 %v413, %v552
        %v574 = vmul.f32 %v414, %v552
        %v575 = vmul.f32 %v415, %v553
        %v576 = vmul.f32 %v416, %v553
        %v577 = vmul.f32 %v417, %v554
        %v578 = vmul.f32 %v418, %v554
        %v579 = vmul.f32 %v419, %v555
        %v580 = vmul.f32 %v420, %v555
        %v581 = vmul.f32 %v421, %v556
        %v582 = vmul.f32 %v422, %v556
        %v583 = vmul.f32 %v423, %v557
        %v584 = vmul.f32 %v424, %v557
        %v585 = vmul.f32 %v425, %v558
        %v586 = vmul.f32 %v426, %v558
        %v587 = vmul.f32 %v427, %v559
        %v588 = vmul.f32 %v428, %v559
        %v589 = vmul.f32 %v429, %v560
        %v590 = vmul.f32 %v430, %v560
        %v591 = vmul.f32 %v431, %v561
        %v592 = vmul.f32 %v432, %v561
        %v593 = vmul.f32 %v433, %v562
        %v594 = vmul.f32 %v434, %v562
        %v596 = vlaneseq
        %v597 = vshrl.u32 %v596, 7
        %v598 = vsub.s32 0, %v597
        %v599 = vrot.slane %v336, %v598
        %v600 = vlaneseq
        %v601 = vshrl.u32 %v600, 7
        %v602 = vsub.s32 1, %v601
        %v603 = vrot.slane %v336, %v602
        %v606 = vmul.f32 %v563, %v599
        %v607 = vmul.f32 %v564, %v603
        %v608 = vmul.f32 %v565, %v599
        %v609 = vmul.f32 %v566, %v603
        %v610 = vmul.f32 %v567, %v599
        %v611 = vmul.f32 %v568, %v603
        %v612 = vmul.f32 %v569, %v599
        %v613 = vmul.f32 %v570, %v603
        %v614 = vmul.f32 %v571, %v599
        %v615 = vmul.f32 %v572, %v603
        %v616 = vmul.f32 %v573, %v599
        %v617 = vmul.f32 %v574, %v603
        %v618 = vmul.f32 %v575, %v599
        %v619 = vmul.f32 %v576, %v603
        %v620 = vmul.f32 %v577, %v599
        %v621 = vmul.f32 %v578, %v603
        %v622 = vmul.f32 %v579, %v599
        %v623 = vmul.f32 %v580, %v603
        %v624 = vmul.f32 %v581, %v599
        %v625 = vmul.f32 %v582, %v603
        %v626 = vmul.f32 %v583, %v599
        %v627 = vmul.f32 %v584, %v603
        %v628 = vmul.f32 %v585, %v599
        %v629 = vmul.f32 %v586, %v603
        %v630 = vmul.f32 %v587, %v599
        %v631 = vmul.f32 %v588, %v603
        %v632 = vmul.f32 %v589, %v599
        %v633 = vmul.f32 %v590, %v603
        %v634 = vmul.f32 %v591, %v599
        %v635 = vmul.f32 %v592, %v603
        %v636 = vmul.f32 %v593, %v599
        %v637 = vmul.f32 %v594, %v603
        %v639 = vlaneseq
        %v640 = vshrl.u32 %v639, 7
        %v641 = vsub.s32 0, %v640
        %v642 = vrot.slane %v337, %v641
        %v643 = vlaneseq
        %v644 = vshrl.u32 %v643, 7
        %v645 = vsub.s32 1, %v644
        %v646 = vrot.slane %v337, %v645
        %v649 = vadd.f32 %v606, %v642
        %v650 = vadd.f32 %v607, %v646
        %v651 = vadd.f32 %v608, %v642
        %v652 = vadd.f32 %v609, %v646
        %v653 = vadd.f32 %v610, %v642
        %v654 = vadd.f32 %v611, %v646
        %v655 = vadd.f32 %v612, %v642
        %v656 = vadd.f32 %v613, %v646
        %v657 = vadd.f32 %v614, %v642
        %v658 = vadd.f32 %v615, %v646
        %v659 = vadd.f32 %v616, %v642
        %v660 = vadd.f32 %v617, %v646
        %v661 = vadd.f32 %v618, %v642
        %v662 = vadd.f32 %v619, %v646
        %v663 = vadd.f32 %v620, %v642
        %v664 = vadd.f32 %v621, %v646
        %v665 = vadd.f32 %v622, %v642
        %v666 = vadd.f32 %v623, %v646
        %v667 = vadd.f32 %v624, %v642
        %v668 = vadd.f32 %v625, %v646
        %v669 = vadd.f32 %v626, %v642
        %v670 = vadd.f32 %v627, %v646
        %v671 = vadd.f32 %v628, %v642
        %v672 = vadd.f32 %v629, %v646
        %v673 = vadd.f32 %v630, %v642
        %v674 = vadd.f32 %v631, %v646
        %v675 = vadd.f32 %v632, %v642
        %v676 = vadd.f32 %v633, %v646
        %v677 = vadd.f32 %v634, %v642
        %v678 = vadd.f32 %v635, %v646
        %v679 = vadd.f32 %v636, %v642
        %v680 = vadd.f32 %v637, %v646
        %v681 = vpack.c.bf16 %v651, %v649
        %v682 = vpack.c.bf16 %v652, %v650
        %v683 = vpack.c.bf16 %v655, %v653
        %v684 = vpack.c.bf16 %v656, %v654
        %v685 = vpack.c.bf16 %v659, %v657
        %v686 = vpack.c.bf16 %v660, %v658
        %v687 = vpack.c.bf16 %v663, %v661
        %v688 = vpack.c.bf16 %v664, %v662
        %v689 = vpack.c.bf16 %v667, %v665
        %v690 = vpack.c.bf16 %v668, %v666
        %v691 = vpack.c.bf16 %v671, %v669
        %v692 = vpack.c.bf16 %v672, %v670
        %v693 = vpack.c.bf16 %v675, %v673
        %v694 = vpack.c.bf16 %v676, %v674
        %v695 = vpack.c.bf16 %v679, %v677
        %v696 = vpack.c.bf16 %v680, %v678
        %v697 = vld [vmem:[#allocation8] sm:$0xff]
        %v698 = vld [vmem:[#allocation8 + $0x8] sm:$0xff]
        %v699 = vld [vmem:[#allocation8 + $0x10] sm:$0xff]
        %v700 = vld [vmem:[#allocation8 + $0x18] sm:$0xff]
        %v701 = vld [vmem:[#allocation8 + $0x20] sm:$0xff]
        %v702 = vld [vmem:[#allocation8 + $0x28] sm:$0xff]
        %v703 = vld [vmem:[#allocation8 + $0x30] sm:$0xff]
        %v704 = vld [vmem:[#allocation8 + $0x38] sm:$0xff]
        %v705 = vld [vmem:[#allocation8 + $0x40] sm:$0xff]
        %v706 = vld [vmem:[#allocation8 + $0x48] sm:$0xff]
        %v707 = vld [vmem:[#allocation8 + $0x50] sm:$0xff]
        %v708 = vld [vmem:[#allocation8 + $0x58] sm:$0xff]
        %v709 = vld [vmem:[#allocation8 + $0x60] sm:$0xff]
        %v710 = vld [vmem:[#allocation8 + $0x68] sm:$0xff]
        %v711 = vld [vmem:[#allocation8 + $0x70] sm:$0xff]
        %v712 = vld [vmem:[#allocation8 + $0x78] sm:$0xff]
        %v713 = vld [vmem:[#allocation8 + $0x80] sm:$0xff]
        %v714 = vld [vmem:[#allocation8 + $0x88] sm:$0xff]
        %v715 = vld [vmem:[#allocation8 + $0x90] sm:$0xff]
        %v716 = vld [vmem:[#allocation8 + $0x98] sm:$0xff]
        %v717 = vld [vmem:[#allocation8 + $0xa0] sm:$0xff]
        %v718 = vld [vmem:[#allocation8 + $0xa8] sm:$0xff]
        %v719 = vld [vmem:[#allocation8 + $0xb0] sm:$0xff]
        %v720 = vld [vmem:[#allocation8 + $0xb8] sm:$0xff]
        %v721 = vld [vmem:[#allocation8 + $0xc0] sm:$0xff]
        %v722 = vld [vmem:[#allocation8 + $0xc8] sm:$0xff]
        %v723 = vld [vmem:[#allocation8 + $0xd0] sm:$0xff]
        %v724 = vld [vmem:[#allocation8 + $0xd8] sm:$0xff]
        %v725 = vld [vmem:[#allocation8 + $0xe0] sm:$0xff]
        %v726 = vld [vmem:[#allocation8 + $0xe8] sm:$0xff]
        %v727 = vld [vmem:[#allocation8 + $0xf0] sm:$0xff]
        %v728 = vld [vmem:[#allocation8 + $0xf8] sm:$0xff]
        %v729 = vld [vmem:[#allocation8 + $0x100] sm:$0xff]
        %v730 = vld [vmem:[#allocation8 + $0x108] sm:$0xff]
        %v731 = vld [vmem:[#allocation8 + $0x110] sm:$0xff]
        %v732 = vld [vmem:[#allocation8 + $0x118] sm:$0xff]
        %v733 = vld [vmem:[#allocation8 + $0x120] sm:$0xff]
        %v734 = vld [vmem:[#allocation8 + $0x128] sm:$0xff]
        %v735 = vld [vmem:[#allocation8 + $0x130] sm:$0xff]
        %v736 = vld [vmem:[#allocation8 + $0x138] sm:$0xff]
        %v737 = vld [vmem:[#allocation8 + $0x140] sm:$0xff]
        %v738 = vld [vmem:[#allocation8 + $0x148] sm:$0xff]
        %v739 = vld [vmem:[#allocation8 + $0x150] sm:$0xff]
        %v740 = vld [vmem:[#allocation8 + $0x158] sm:$0xff]
        %v741 = vld [vmem:[#allocation8 + $0x160] sm:$0xff]
        %v742 = vld [vmem:[#allocation8 + $0x168] sm:$0xff]
        %v743 = vld [vmem:[#allocation8 + $0x170] sm:$0xff]
        %v744 = vld [vmem:[#allocation8 + $0x178] sm:$0xff]
        %v745 = vld [vmem:[#allocation8 + $0x180] sm:$0xff]
        %v746 = vld [vmem:[#allocation8 + $0x188] sm:$0xff]
        %v747 = vld [vmem:[#allocation8 + $0x190] sm:$0xff]
        %v748 = vld [vmem:[#allocation8 + $0x198] sm:$0xff]
        %v749 = vld [vmem:[#allocation8 + $0x1a0] sm:$0xff]
        %v750 = vld [vmem:[#allocation8 + $0x1a8] sm:$0xff]
        %v751 = vld [vmem:[#allocation8 + $0x1b0] sm:$0xff]
        %v752 = vld [vmem:[#allocation8 + $0x1b8] sm:$0xff]
        %v753 = vld [vmem:[#allocation8 + $0x1c0] sm:$0xff]
        %v754 = vld [vmem:[#allocation8 + $0x1c8] sm:$0xff]
        %v755 = vld [vmem:[#allocation8 + $0x1d0] sm:$0xff]
        %v756 = vld [vmem:[#allocation8 + $0x1d8] sm:$0xff]
        %v757 = vld [vmem:[#allocation8 + $0x1e0] sm:$0xff]
        %v758 = vld [vmem:[#allocation8 + $0x1e8] sm:$0xff]
        %v759 = vld [vmem:[#allocation8 + $0x1f0] sm:$0xff]
        %v760 = vld [vmem:[#allocation8 + $0x1f8] sm:$0xff]
        %v761 = vld [vmem:[#allocation8 + $0x200] sm:$0xff]
        %v762 = vld [vmem:[#allocation8 + $0x208] sm:$0xff]
        %v763 = vld [vmem:[#allocation8 + $0x210] sm:$0xff]
        %v764 = vld [vmem:[#allocation8 + $0x218] sm:$0xff]
        %v765 = vld [vmem:[#allocation8 + $0x220] sm:$0xff]
        %v766 = vld [vmem:[#allocation8 + $0x228] sm:$0xff]
        %v767 = vld [vmem:[#allocation8 + $0x230] sm:$0xff]
        %v768 = vld [vmem:[#allocation8 + $0x238] sm:$0xff]
        %v769 = vld [vmem:[#allocation8 + $0x240] sm:$0xff]
        %v770 = vld [vmem:[#allocation8 + $0x248] sm:$0xff]
        %v771 = vld [vmem:[#allocation8 + $0x250] sm:$0xff]
        %v772 = vld [vmem:[#allocation8 + $0x258] sm:$0xff]
        %v773 = vld [vmem:[#allocation8 + $0x260] sm:$0xff]
        %v774 = vld [vmem:[#allocation8 + $0x268] sm:$0xff]
        %v775 = vld [vmem:[#allocation8 + $0x270] sm:$0xff]
        %v776 = vld [vmem:[#allocation8 + $0x278] sm:$0xff]
        %v777 = vld [vmem:[#allocation8 + $0x280] sm:$0xff]
        %v778 = vld [vmem:[#allocation8 + $0x288] sm:$0xff]
        %v779 = vld [vmem:[#allocation8 + $0x290] sm:$0xff]
        %v780 = vld [vmem:[#allocation8 + $0x298] sm:$0xff]
        %v781 = vld [vmem:[#allocation8 + $0x2a0] sm:$0xff]
        %v782 = vld [vmem:[#allocation8 + $0x2a8] sm:$0xff]
        %v783 = vld [vmem:[#allocation8 + $0x2b0] sm:$0xff]
        %v784 = vld [vmem:[#allocation8 + $0x2b8] sm:$0xff]
        %v785 = vld [vmem:[#allocation8 + $0x2c0] sm:$0xff]
        %v786 = vld [vmem:[#allocation8 + $0x2c8] sm:$0xff]
        %v787 = vld [vmem:[#allocation8 + $0x2d0] sm:$0xff]
        %v788 = vld [vmem:[#allocation8 + $0x2d8] sm:$0xff]
        %v789 = vld [vmem:[#allocation8 + $0x2e0] sm:$0xff]
        %v790 = vld [vmem:[#allocation8 + $0x2e8] sm:$0xff]
        %v791 = vld [vmem:[#allocation8 + $0x2f0] sm:$0xff]
        %v792 = vld [vmem:[#allocation8 + $0x2f8] sm:$0xff]
        %v793 = vld [vmem:[%s4] sm:$0x3f]
        %v795 = vlaneseq
        %v796 = vshrl.u32 %v795, 7
        %v797 = vsub.s32 0, %v796
        %v798 = vrot.slane %v793, %v797
        %v799 = vlaneseq
        %v800 = vshrl.u32 %v799, 7
        %v801 = vsub.s32 1, %v800
        %v802 = vrot.slane %v793, %v801
        %v803 = vlaneseq
        %v804 = vshrl.u32 %v803, 7
        %v805 = vsub.s32 2, %v804
        %v806 = vrot.slane %v793, %v805
        %v807 = vlaneseq
        %v808 = vshrl.u32 %v807, 7
        %v809 = vsub.s32 3, %v808
        %v810 = vrot.slane %v793, %v809
        %v811 = vlaneseq
        %v812 = vshrl.u32 %v811, 7
        %v813 = vsub.s32 4, %v812
        %v814 = vrot.slane %v793, %v813
        %v815 = vlaneseq
        %v816 = vshrl.u32 %v815, 7
        %v817 = vsub.s32 5, %v816
        %v818 = vrot.slane %v793, %v817
        %v921 = vunpack.c.l.b16 %v697
        %v922 = vunpack.c.h.b16 %v697
        %v923 = vunpack.c.l.b16 %v698
        %v924 = vunpack.c.h.b16 %v698
        %v925 = vunpack.c.l.b16 %v699
        %v926 = vunpack.c.h.b16 %v699
        %v927 = vunpack.c.l.b16 %v700
        %v928 = vunpack.c.h.b16 %v700
        %v929 = vunpack.c.l.b16 %v701
        %v930 = vunpack.c.h.b16 %v701
        %v931 = vunpack.c.l.b16 %v702
        %v932 = vunpack.c.h.b16 %v702
        %v933 = vunpack.c.l.b16 %v703
        %v934 = vunpack.c.h.b16 %v703
        %v935 = vunpack.c.l.b16 %v704
        %v936 = vunpack.c.h.b16 %v704
        %v937 = vunpack.c.l.b16 %v705
        %v938 = vunpack.c.h.b16 %v705
        %v939 = vunpack.c.l.b16 %v706
        %v940 = vunpack.c.h.b16 %v706
        %v941 = vunpack.c.l.b16 %v707
        %v942 = vunpack.c.h.b16 %v707
        %v943 = vunpack.c.l.b16 %v708
        %v944 = vunpack.c.h.b16 %v708
        %v945 = vunpack.c.l.b16 %v709
        %v946 = vunpack.c.h.b16 %v709
        %v947 = vunpack.c.l.b16 %v710
        %v948 = vunpack.c.h.b16 %v710
        %v949 = vunpack.c.l.b16 %v711
        %v950 = vunpack.c.h.b16 %v711
        %v951 = vunpack.c.l.b16 %v712
        %v952 = vunpack.c.h.b16 %v712
        %v953 = vunpack.c.l.b16 %v713
        %v954 = vunpack.c.h.b16 %v713
        %v955 = vunpack.c.l.b16 %v714
        %v956 = vunpack.c.h.b16 %v714
        %v957 = vunpack.c.l.b16 %v715
        %v958 = vunpack.c.h.b16 %v715
        %v959 = vunpack.c.l.b16 %v716
        %v960 = vunpack.c.h.b16 %v716
        %v961 = vunpack.c.l.b16 %v717
        %v962 = vunpack.c.h.b16 %v717
        %v963 = vunpack.c.l.b16 %v718
        %v964 = vunpack.c.h.b16 %v718
        %v965 = vunpack.c.l.b16 %v719
        %v966 = vunpack.c.h.b16 %v719
        %v967 = vunpack.c.l.b16 %v720
        %v968 = vunpack.c.h.b16 %v720
        %v969 = vunpack.c.l.b16 %v721
        %v970 = vunpack.c.h.b16 %v721
        %v971 = vunpack.c.l.b16 %v722
        %v972 = vunpack.c.h.b16 %v722
        %v973 = vunpack.c.l.b16 %v723
        %v974 = vunpack.c.h.b16 %v723
        %v975 = vunpack.c.l.b16 %v724
        %v976 = vunpack.c.h.b16 %v724
        %v977 = vunpack.c.l.b16 %v725
        %v978 = vunpack.c.h.b16 %v725
        %v979 = vunpack.c.l.b16 %v726
        %v980 = vunpack.c.h.b16 %v726
        %v981 = vunpack.c.l.b16 %v727
        %v982 = vunpack.c.h.b16 %v727
        %v983 = vunpack.c.l.b16 %v728
        %v984 = vunpack.c.h.b16 %v728
        %v985 = vunpack.c.l.b16 %v729
        %v986 = vunpack.c.h.b16 %v729
        %v987 = vunpack.c.l.b16 %v730
        %v988 = vunpack.c.h.b16 %v730
        %v989 = vunpack.c.l.b16 %v731
        %v990 = vunpack.c.h.b16 %v731
        %v991 = vunpack.c.l.b16 %v732
        %v992 = vunpack.c.h.b16 %v732
        %v993 = vunpack.c.l.b16 %v733
        %v994 = vunpack.c.h.b16 %v733
        %v995 = vunpack.c.l.b16 %v734
        %v996 = vunpack.c.h.b16 %v734
        %v997 = vunpack.c.l.b16 %v735
        %v998 = vunpack.c.h.b16 %v735
        %v999 = vunpack.c.l.b16 %v736
        %v1000 = vunpack.c.h.b16 %v736
        %v1001 = vunpack.c.l.b16 %v737
        %v1002 = vunpack.c.h.b16 %v737
        %v1003 = vunpack.c.l.b16 %v738
        %v1004 = vunpack.c.h.b16 %v738
        %v1005 = vunpack.c.l.b16 %v739
        %v1006 = vunpack.c.h.b16 %v739
        %v1007 = vunpack.c.l.b16 %v740
        %v1008 = vunpack.c.h.b16 %v740
        %v1009 = vunpack.c.l.b16 %v741
        %v1010 = vunpack.c.h.b16 %v741
        %v1011 = vunpack.c.l.b16 %v742
        %v1012 = vunpack.c.h.b16 %v742
        %v1013 = vunpack.c.l.b16 %v743
        %v1014 = vunpack.c.h.b16 %v743
        %v1015 = vunpack.c.l.b16 %v744
        %v1016 = vunpack.c.h.b16 %v744
        %v1017 = vunpack.c.l.b16 %v745
        %v1018 = vunpack.c.h.b16 %v745
        %v1019 = vunpack.c.l.b16 %v746
        %v1020 = vunpack.c.h.b16 %v746
        %v1021 = vunpack.c.l.b16 %v747
        %v1022 = vunpack.c.h.b16 %v747
        %v1023 = vunpack.c.l.b16 %v748
        %v1024 = vunpack.c.h.b16 %v748
        %v1025 = vunpack.c.l.b16 %v749
        %v1026 = vunpack.c.h.b16 %v749
        %v1027 = vunpack.c.l.b16 %v750
        %v1028 = vunpack.c.h.b16 %v750
        %v1029 = vunpack.c.l.b16 %v751
        %v1030 = vunpack.c.h.b16 %v751
        %v1031 = vunpack.c.l.b16 %v752
        %v1032 = vunpack.c.h.b16 %v752
        %v1033 = vunpack.c.l.b16 %v753
        %v1034 = vunpack.c.h.b16 %v753
        %v1035 = vunpack.c.l.b16 %v754
        %v1036 = vunpack.c.h.b16 %v754
        %v1037 = vunpack.c.l.b16 %v755
        %v1038 = vunpack.c.h.b16 %v755
        %v1039 = vunpack.c.l.b16 %v756
        %v1040 = vunpack.c.h.b16 %v756
        %v1041 = vunpack.c.l.b16 %v757
        %v1042 = vunpack.c.h.b16 %v757
        %v1043 = vunpack.c.l.b16 %v758
        %v1044 = vunpack.c.h.b16 %v758
        %v1045 = vunpack.c.l.b16 %v759
        %v1046 = vunpack.c.h.b16 %v759
        %v1047 = vunpack.c.l.b16 %v760
        %v1048 = vunpack.c.h.b16 %v760
        %v1049 = vunpack.c.l.b16 %v761
        %v1050 = vunpack.c.h.b16 %v761
        %v1051 = vunpack.c.l.b16 %v762
        %v1052 = vunpack.c.h.b16 %v762
        %v1053 = vunpack.c.l.b16 %v763
        %v1054 = vunpack.c.h.b16 %v763
        %v1055 = vunpack.c.l.b16 %v764
        %v1056 = vunpack.c.h.b16 %v764
        %v1057 = vunpack.c.l.b16 %v765
        %v1058 = vunpack.c.h.b16 %v765
        %v1059 = vunpack.c.l.b16 %v766
        %v1060 = vunpack.c.h.b16 %v766
        %v1061 = vunpack.c.l.b16 %v767
        %v1062 = vunpack.c.h.b16 %v767
        %v1063 = vunpack.c.l.b16 %v768
        %v1064 = vunpack.c.h.b16 %v768
        %v1065 = vunpack.c.l.b16 %v769
        %v1066 = vunpack.c.h.b16 %v769
        %v1067 = vunpack.c.l.b16 %v770
        %v1068 = vunpack.c.h.b16 %v770
        %v1069 = vunpack.c.l.b16 %v771
        %v1070 = vunpack.c.h.b16 %v771
        %v1071 = vunpack.c.l.b16 %v772
        %v1072 = vunpack.c.h.b16 %v772
        %v1073 = vunpack.c.l.b16 %v773
        %v1074 = vunpack.c.h.b16 %v773
        %v1075 = vunpack.c.l.b16 %v774
        %v1076 = vunpack.c.h.b16 %v774
        %v1077 = vunpack.c.l.b16 %v775
        %v1078 = vunpack.c.h.b16 %v775
        %v1079 = vunpack.c.l.b16 %v776
        %v1080 = vunpack.c.h.b16 %v776
        %v1081 = vunpack.c.l.b16 %v777
        %v1082 = vunpack.c.h.b16 %v777
        %v1083 = vunpack.c.l.b16 %v778
        %v1084 = vunpack.c.h.b16 %v778
        %v1085 = vunpack.c.l.b16 %v779
        %v1086 = vunpack.c.h.b16 %v779
        %v1087 = vunpack.c.l.b16 %v780
        %v1088 = vunpack.c.h.b16 %v780
        %v1089 = vunpack.c.l.b16 %v781
        %v1090 = vunpack.c.h.b16 %v781
        %v1091 = vunpack.c.l.b16 %v782
        %v1092 = vunpack.c.h.b16 %v782
        %v1093 = vunpack.c.l.b16 %v783
        %v1094 = vunpack.c.h.b16 %v783
        %v1095 = vunpack.c.l.b16 %v784
        %v1096 = vunpack.c.h.b16 %v784
        %v1097 = vunpack.c.l.b16 %v785
        %v1098 = vunpack.c.h.b16 %v785
        %v1099 = vunpack.c.l.b16 %v786
        %v1100 = vunpack.c.h.b16 %v786
        %v1101 = vunpack.c.l.b16 %v787
        %v1102 = vunpack.c.h.b16 %v787
        %v1103 = vunpack.c.l.b16 %v788
        %v1104 = vunpack.c.h.b16 %v788
        %v1105 = vunpack.c.l.b16 %v789
        %v1106 = vunpack.c.h.b16 %v789
        %v1107 = vunpack.c.l.b16 %v790
        %v1108 = vunpack.c.h.b16 %v790
        %v1109 = vunpack.c.l.b16 %v791
        %v1110 = vunpack.c.h.b16 %v791
        %v1111 = vunpack.c.l.b16 %v792
        %v1112 = vunpack.c.h.b16 %v792
        %v1113 = vpack.c.b16 %v927, %v921
        %v1114 = vpack.c.b16 %v928, %v922
        %v1115 = vpack.c.b16 %v929, %v923
        %v1116 = vpack.c.b16 %v930, %v924
        %v1117 = vpack.c.b16 %v931, %v925
        %v1118 = vpack.c.b16 %v932, %v926
        %v1119 = vpack.c.b16 %v939, %v933
        %v1120 = vpack.c.b16 %v940, %v934
        %v1121 = vpack.c.b16 %v941, %v935
        %v1122 = vpack.c.b16 %v942, %v936
        %v1123 = vpack.c.b16 %v943, %v937
        %v1124 = vpack.c.b16 %v944, %v938
        %v1125 = vpack.c.b16 %v951, %v945
        %v1126 = vpack.c.b16 %v952, %v946
        %v1127 = vpack.c.b16 %v953, %v947
        %v1128 = vpack.c.b16 %v954, %v948
        %v1129 = vpack.c.b16 %v955, %v949
        %v1130 = vpack.c.b16 %v956, %v950
        %v1131 = vpack.c.b16 %v963, %v957
        %v1132 = vpack.c.b16 %v964, %v958
        %v1133 = vpack.c.b16 %v965, %v959
        %v1134 = vpack.c.b16 %v966, %v960
        %v1135 = vpack.c.b16 %v967, %v961
        %v1136 = vpack.c.b16 %v968, %v962
        %v1137 = vpack.c.b16 %v975, %v969
        %v1138 = vpack.c.b16 %v976, %v970
        %v1139 = vpack.c.b16 %v977, %v971
        %v1140 = vpack.c.b16 %v978, %v972
        %v1141 = vpack.c.b16 %v979, %v973
        %v1142 = vpack.c.b16 %v980, %v974
        %v1143 = vpack.c.b16 %v987, %v981
        %v1144 = vpack.c.b16 %v988, %v982
        %v1145 = vpack.c.b16 %v989, %v983
        %v1146 = vpack.c.b16 %v990, %v984
        %v1147 = vpack.c.b16 %v991, %v985
        %v1148 = vpack.c.b16 %v992, %v986
        %v1149 = vpack.c.b16 %v999, %v993
        %v1150 = vpack.c.b16 %v1000, %v994
        %v1151 = vpack.c.b16 %v1001, %v995
        %v1152 = vpack.c.b16 %v1002, %v996
        %v1153 = vpack.c.b16 %v1003, %v997
        %v1154 = vpack.c.b16 %v1004, %v998
        %v1155 = vpack.c.b16 %v1011, %v1005
        %v1156 = vpack.c.b16 %v1012, %v1006
        %v1157 = vpack.c.b16 %v1013, %v1007
        %v1158 = vpack.c.b16 %v1014, %v1008
        %v1159 = vpack.c.b16 %v1015, %v1009
        %v1160 = vpack.c.b16 %v1016, %v1010
        %v1161 = vpack.c.b16 %v1023, %v1017
        %v1162 = vpack.c.b16 %v1024, %v1018
        %v1163 = vpack.c.b16 %v1025, %v1019
        %v1164 = vpack.c.b16 %v1026, %v1020
        %v1165 = vpack.c.b16 %v1027, %v1021
        %v1166 = vpack.c.b16 %v1028, %v1022
        %v1167 = vpack.c.b16 %v1035, %v1029
        %v1168 = vpack.c.b16 %v1036, %v1030
        %v1169 = vpack.c.b16 %v1037, %v1031
        %v1170 = vpack.c.b16 %v1038, %v1032
        %v1171 = vpack.c.b16 %v1039, %v1033
        %v1172 = vpack.c.b16 %v1040, %v1034
        %v1173 = vpack.c.b16 %v1047, %v1041
        %v1174 = vpack.c.b16 %v1048, %v1042
        %v1175 = vpack.c.b16 %v1049, %v1043
        %v1176 = vpack.c.b16 %v1050, %v1044
        %v1177 = vpack.c.b16 %v1051, %v1045
        %v1178 = vpack.c.b16 %v1052, %v1046
        %v1179 = vpack.c.b16 %v1059, %v1053
        %v1180 = vpack.c.b16 %v1060, %v1054
        %v1181 = vpack.c.b16 %v1061, %v1055
        %v1182 = vpack.c.b16 %v1062, %v1056
        %v1183 = vpack.c.b16 %v1063, %v1057
        %v1184 = vpack.c.b16 %v1064, %v1058
        %v1185 = vpack.c.b16 %v1071, %v1065
        %v1186 = vpack.c.b16 %v1072, %v1066
        %v1187 = vpack.c.b16 %v1073, %v1067
        %v1188 = vpack.c.b16 %v1074, %v1068
        %v1189 = vpack.c.b16 %v1075, %v1069
        %v1190 = vpack.c.b16 %v1076, %v1070
        %v1191 = vpack.c.b16 %v1083, %v1077
        %v1192 = vpack.c.b16 %v1084, %v1078
        %v1193 = vpack.c.b16 %v1085, %v1079
        %v1194 = vpack.c.b16 %v1086, %v1080
        %v1195 = vpack.c.b16 %v1087, %v1081
        %v1196 = vpack.c.b16 %v1088, %v1082
        %v1197 = vpack.c.b16 %v1095, %v1089
        %v1198 = vpack.c.b16 %v1096, %v1090
        %v1199 = vpack.c.b16 %v1097, %v1091
        %v1200 = vpack.c.b16 %v1098, %v1092
        %v1201 = vpack.c.b16 %v1099, %v1093
        %v1202 = vpack.c.b16 %v1100, %v1094
        %v1203 = vpack.c.b16 %v1107, %v1101
        %v1204 = vpack.c.b16 %v1108, %v1102
        %v1205 = vpack.c.b16 %v1109, %v1103
        %v1206 = vpack.c.b16 %v1110, %v1104
        %v1207 = vpack.c.b16 %v1111, %v1105
        %v1208 = vpack.c.b16 %v1112, %v1106
        %1305 = vmatprep.subr.bf16.mxu0 %v1156
        %1306 = vmatpush1.bf16.msra.mxu0 %v1155
        %1307 = vmatprep.subr.bf16.mxu0 %v1150
        %1308 = vmatpush1.bf16.msra.mxu0 %v1149
        %1309 = vmatprep.subr.bf16.mxu0 %v1144
        %1310 = vmatpush1.bf16.msra.mxu0 %v1143
        %1311 = vmatprep.subr.bf16.mxu0 %v1138
        %1312 = vmatpush1.bf16.msra.mxu0 %v1137
        %1313 = vmatprep.subr.bf16.mxu0 %v1132
        %1314 = vmatpush1.bf16.msra.mxu0 %v1131
        %1315 = vmatprep.subr.bf16.mxu0 %v1126
        %1316 = vmatpush1.bf16.msra.mxu0 %v1125
        %1317 = vmatprep.subr.bf16.mxu0 %v1120
        %1318 = vmatpush1.bf16.msra.mxu0 %v1119
        %1319 = vmatprep.subr.bf16.mxu0 %v1114
        %1320 = vmatpush1.bf16.msra.mxu0 %v1113
        %1321 = vmatprep.subr.bf16.mxu0 %v1204
        %1322 = vmatpush2.bf16.msra.mxu0 %v1203
        %1323 = vmatprep.subr.bf16.mxu0 %v1198
        %1324 = vmatpush2.bf16.msra.mxu0 %v1197
        %1325 = vmatprep.subr.bf16.mxu0 %v1192
        %1326 = vmatpush2.bf16.msra.mxu0 %v1191
        %1327 = vmatprep.subr.bf16.mxu0 %v1186
        %1328 = vmatpush2.bf16.msra.mxu0 %v1185
        %1329 = vmatprep.subr.bf16.mxu0 %v1180
        %1330 = vmatpush2.bf16.msra.mxu0 %v1179
        %1331 = vmatprep.subr.bf16.mxu0 %v1174
        %1332 = vmatpush2.bf16.msra.mxu0 %v1173
        %1333 = vmatprep.subr.bf16.mxu0 %v1168
        %1334 = vmatpush2.bf16.msra.mxu0 %v1167
        %1335 = vmatprep.subr.bf16.mxu0 %v1162
        %1336 = vmatpush2.bf16.msra.mxu0 %v1161
        %1337 = vmatprep.mubr.bf16.mxu0 %v682
        %1338 = vmatmul.mubr.bf16.gmra.mxu0 %v681
        %v1339 = vpop.f32.mrf.mxu0
        %v1340 = vadd.f32 %v798, %v1339
        %v1341 = vpop.f32.mrf.mxu0
        %v1342 = vadd.f32 %v802, %v1341
        %v1343 = vpop.f32.mrf.mxu0
        %v1344 = vadd.f32 %v798, %v1343
        %v1345 = vpop.f32.mrf.mxu0
        %v1346 = vadd.f32 %v802, %v1345
        %1347 = vmatprep.mubr.bf16.mxu0 %v684
        %1348 = vmatmul.mubr.bf16.gmra.mxu0 %v683
        %v1349 = vpop.f32.mrf.mxu0
        %v1350 = vadd.f32 %v798, %v1349
        %v1351 = vpop.f32.mrf.mxu0
        %v1352 = vadd.f32 %v802, %v1351
        %v1353 = vpop.f32.mrf.mxu0
        %v1354 = vadd.f32 %v798, %v1353
        %v1355 = vpop.f32.mrf.mxu0
        %v1356 = vadd.f32 %v802, %v1355
        %1357 = vmatprep.mubr.bf16.mxu0 %v686
        %1358 = vmatmul.mubr.bf16.gmra.mxu0 %v685
        %v1359 = vpop.f32.mrf.mxu0
        %v1360 = vadd.f32 %v798, %v1359
        %v1361 = vpop.f32.mrf.mxu0
        %v1362 = vadd.f32 %v802, %v1361
        %v1363 = vpop.f32.mrf.mxu0
        %v1364 = vadd.f32 %v798, %v1363
        %v1365 = vpop.f32.mrf.mxu0
        %v1366 = vadd.f32 %v802, %v1365
        %1367 = vmatprep.mubr.bf16.mxu0 %v688
        %1368 = vmatmul.mubr.bf16.gmra.mxu0 %v687
        %v1369 = vpop.f32.mrf.mxu0
        %v1370 = vadd.f32 %v798, %v1369
        %v1371 = vpop.f32.mrf.mxu0
        %v1372 = vadd.f32 %v802, %v1371
        %v1373 = vpop.f32.mrf.mxu0
        %v1374 = vadd.f32 %v798, %v1373
        %v1375 = vpop.f32.mrf.mxu0
        %v1376 = vadd.f32 %v802, %v1375
        %1377 = vmatprep.mubr.bf16.mxu0 %v690
        %1378 = vmatmul.mubr.bf16.gmra.mxu0 %v689
        %v1379 = vpop.f32.mrf.mxu0
        %v1380 = vadd.f32 %v798, %v1379
        %v1381 = vpop.f32.mrf.mxu0
        %v1382 = vadd.f32 %v802, %v1381
        %v1383 = vpop.f32.mrf.mxu0
        %v1384 = vadd.f32 %v798, %v1383
        %v1385 = vpop.f32.mrf.mxu0
        %v1386 = vadd.f32 %v802, %v1385
        %1387 = vmatprep.mubr.bf16.mxu0 %v692
        %1388 = vmatmul.mubr.bf16.gmra.mxu0 %v691
        %v1389 = vpop.f32.mrf.mxu0
        %v1390 = vadd.f32 %v798, %v1389
        %v1391 = vpop.f32.mrf.mxu0
        %v1392 = vadd.f32 %v802, %v1391
        %v1393 = vpop.f32.mrf.mxu0
        %v1394 = vadd.f32 %v798, %v1393
        %v1395 = vpop.f32.mrf.mxu0
        %v1396 = vadd.f32 %v802, %v1395
        %1397 = vmatprep.mubr.bf16.mxu0 %v694
        %1398 = vmatmul.mubr.bf16.gmra.mxu0 %v693
        %v1399 = vpop.f32.mrf.mxu0
        %v1400 = vadd.f32 %v798, %v1399
        %v1401 = vpop.f32.mrf.mxu0
        %v1402 = vadd.f32 %v802, %v1401
        %v1403 = vpop.f32.mrf.mxu0
        %v1404 = vadd.f32 %v798, %v1403
        %v1405 = vpop.f32.mrf.mxu0
        %v1406 = vadd.f32 %v802, %v1405
        %1407 = vmatprep.mubr.bf16.mxu0 %v696
        %1408 = vmatmul.mubr.bf16.gmra.mxu0 %v695
        %v1409 = vpop.f32.mrf.mxu0
        %v1410 = vadd.f32 %v798, %v1409
        %v1411 = vpop.f32.mrf.mxu0
        %v1412 = vadd.f32 %v802, %v1411
        %v1413 = vpop.f32.mrf.mxu0
        %v1414 = vadd.f32 %v798, %v1413
        %v1415 = vpop.f32.mrf.mxu0
        %v1416 = vadd.f32 %v802, %v1415
        %1417 = vdwg.mxu0
        %1418 = vmatprep.subr.bf16.mxu0 %v1158
        %1419 = vmatpush1.bf16.msra.mxu0 %v1157
        %1420 = vmatprep.subr.bf16.mxu0 %v1152
        %1421 = vmatpush1.bf16.msra.mxu0 %v1151
        %1422 = vmatprep.subr.bf16.mxu0 %v1146
        %1423 = vmatpush1.bf16.msra.mxu0 %v1145
        %1424 = vmatprep.subr.bf16.mxu0 %v1140
        %1425 = vmatpush1.bf16.msra.mxu0 %v1139
        %1426 = vmatprep.subr.bf16.mxu0 %v1134
        %1427 = vmatpush1.bf16.msra.mxu0 %v1133
        %1428 = vmatprep.subr.bf16.mxu0 %v1128
        %1429 = vmatpush1.bf16.msra.mxu0 %v1127
        %1430 = vmatprep.subr.bf16.mxu0 %v1122
        %1431 = vmatpush1.bf16.msra.mxu0 %v1121
        %1432 = vmatprep.subr.bf16.mxu0 %v1116
        %1433 = vmatpush1.bf16.msra.mxu0 %v1115
        %1434 = vmatprep.subr.bf16.mxu0 %v1206
        %1435 = vmatpush2.bf16.msra.mxu0 %v1205
        %1436 = vmatprep.subr.bf16.mxu0 %v1200
        %1437 = vmatpush2.bf16.msra.mxu0 %v1199
        %1438 = vmatprep.subr.bf16.mxu0 %v1194
        %1439 = vmatpush2.bf16.msra.mxu0 %v1193
        %1440 = vmatprep.subr.bf16.mxu0 %v1188
        %1441 = vmatpush2.bf16.msra.mxu0 %v1187
        %1442 = vmatprep.subr.bf16.mxu0 %v1182
        %1443 = vmatpush2.bf16.msra.mxu0 %v1181
        %1444 = vmatprep.subr.bf16.mxu0 %v1176
        %1445 = vmatpush2.bf16.msra.mxu0 %v1175
        %1446 = vmatprep.subr.bf16.mxu0 %v1170
        %1447 = vmatpush2.bf16.msra.mxu0 %v1169
        %1448 = vmatprep.subr.bf16.mxu0 %v1164
        %1449 = vmatpush2.bf16.msra.mxu0 %v1163
        %1450 = vmatprep.mubr.bf16.mxu0 %v682
        %1451 = vmatmul.mubr.bf16.gmra.mxu0 %v681
        %v1452 = vpop.f32.mrf.mxu0
        %v1453 = vadd.f32 %v806, %v1452
        %v1454 = vpop.f32.mrf.mxu0
        %v1455 = vadd.f32 %v810, %v1454
        %v1456 = vpop.f32.mrf.mxu0
        %v1457 = vadd.f32 %v806, %v1456
        %v1458 = vpop.f32.mrf.mxu0
        %v1459 = vadd.f32 %v810, %v1458
        %1460 = vmatprep.mubr.bf16.mxu0 %v684
        %1461 = vmatmul.mubr.bf16.gmra.mxu0 %v683
        %v1462 = vpop.f32.mrf.mxu0
        %v1463 = vadd.f32 %v806, %v1462
        %v1464 = vpop.f32.mrf.mxu0
        %v1465 = vadd.f32 %v810, %v1464
        %v1466 = vpop.f32.mrf.mxu0
        %v1467 = vadd.f32 %v806, %v1466
        %v1468 = vpop.f32.mrf.mxu0
        %v1469 = vadd.f32 %v810, %v1468
        %1470 = vmatprep.mubr.bf16.mxu0 %v686
        %1471 = vmatmul.mubr.bf16.gmra.mxu0 %v685
        %v1472 = vpop.f32.mrf.mxu0
        %v1473 = vadd.f32 %v806, %v1472
        %v1474 = vpop.f32.mrf.mxu0
        %v1475 = vadd.f32 %v810, %v1474
        %v1476 = vpop.f32.mrf.mxu0
        %v1477 = vadd.f32 %v806, %v1476
        %v1478 = vpop.f32.mrf.mxu0
        %v1479 = vadd.f32 %v810, %v1478
        %1480 = vmatprep.mubr.bf16.mxu0 %v688
        %1481 = vmatmul.mubr.bf16.gmra.mxu0 %v687
        %v1482 = vpop.f32.mrf.mxu0
        %v1483 = vadd.f32 %v806, %v1482
        %v1484 = vpop.f32.mrf.mxu0
        %v1485 = vadd.f32 %v810, %v1484
        %v1486 = vpop.f32.mrf.mxu0
        %v1487 = vadd.f32 %v806, %v1486
        %v1488 = vpop.f32.mrf.mxu0
        %v1489 = vadd.f32 %v810, %v1488
        %1490 = vmatprep.mubr.bf16.mxu0 %v690
        %1491 = vmatmul.mubr.bf16.gmra.mxu0 %v689
        %v1492 = vpop.f32.mrf.mxu0
        %v1493 = vadd.f32 %v806, %v1492
        %v1494 = vpop.f32.mrf.mxu0
        %v1495 = vadd.f32 %v810, %v1494
        %v1496 = vpop.f32.mrf.mxu0
        %v1497 = vadd.f32 %v806, %v1496
        %v1498 = vpop.f32.mrf.mxu0
        %v1499 = vadd.f32 %v810, %v1498
        %1500 = vmatprep.mubr.bf16.mxu0 %v692
        %1501 = vmatmul.mubr.bf16.gmra.mxu0 %v691
        %v1502 = vpop.f32.mrf.mxu0
        %v1503 = vadd.f32 %v806, %v1502
        %v1504 = vpop.f32.mrf.mxu0
        %v1505 = vadd.f32 %v810, %v1504
        %v1506 = vpop.f32.mrf.mxu0
        %v1507 = vadd.f32 %v806, %v1506
        %v1508 = vpop.f32.mrf.mxu0
        %v1509 = vadd.f32 %v810, %v1508
        %1510 = vmatprep.mubr.bf16.mxu0 %v694
        %1511 = vmatmul.mubr.bf16.gmra.mxu0 %v693
        %v1512 = vpop.f32.mrf.mxu0
        %v1513 = vadd.f32 %v806, %v1512
        %v1514 = vpop.f32.mrf.mxu0
        %v1515 = vadd.f32 %v810, %v1514
        %v1516 = vpop.f32.mrf.mxu0
        %v1517 = vadd.f32 %v806, %v1516
        %v1518 = vpop.f32.mrf.mxu0
        %v1519 = vadd.f32 %v810, %v1518
        %1520 = vmatprep.mubr.bf16.mxu0 %v696
        %1521 = vmatmul.mubr.bf16.gmra.mxu0 %v695
        %v1522 = vpop.f32.mrf.mxu0
        %v1523 = vadd.f32 %v806, %v1522
        %v1524 = vpop.f32.mrf.mxu0
        %v1525 = vadd.f32 %v810, %v1524
        %v1526 = vpop.f32.mrf.mxu0
        %v1527 = vadd.f32 %v806, %v1526
        %v1528 = vpop.f32.mrf.mxu0
        %v1529 = vadd.f32 %v810, %v1528
        %1530 = vdwg.mxu0
        %1531 = vmatprep.subr.bf16.mxu0 %v1160
        %1532 = vmatpush1.bf16.msra.mxu0 %v1159
        %1533 = vmatprep.subr.bf16.mxu0 %v1154
        %1534 = vmatpush1.bf16.msra.mxu0 %v1153
        %1535 = vmatprep.subr.bf16.mxu0 %v1148
        %1536 = vmatpush1.bf16.msra.mxu0 %v1147
        %1537 = vmatprep.subr.bf16.mxu0 %v1142
        %1538 = vmatpush1.bf16.msra.mxu0 %v1141
        %1539 = vmatprep.subr.bf16.mxu0 %v1136
        %1540 = vmatpush1.bf16.msra.mxu0 %v1135
        %1541 = vmatprep.subr.bf16.mxu0 %v1130
        %1542 = vmatpush1.bf16.msra.mxu0 %v1129
        %1543 = vmatprep.subr.bf16.mxu0 %v1124
        %1544 = vmatpush1.bf16.msra.mxu0 %v1123
        %1545 = vmatprep.subr.bf16.mxu0 %v1118
        %1546 = vmatpush1.bf16.msra.mxu0 %v1117
        %1547 = vmatprep.subr.bf16.mxu0 %v1208
        %1548 = vmatpush2.bf16.msra.mxu0 %v1207
        %1549 = vmatprep.subr.bf16.mxu0 %v1202
        %1550 = vmatpush2.bf16.msra.mxu0 %v1201
        %1551 = vmatprep.subr.bf16.mxu0 %v1196
        %1552 = vmatpush2.bf16.msra.mxu0 %v1195
        %1553 = vmatprep.subr.bf16.mxu0 %v1190
        %1554 = vmatpush2.bf16.msra.mxu0 %v1189
        %1555 = vmatprep.subr.bf16.mxu0 %v1184
        %1556 = vmatpush2.bf16.msra.mxu0 %v1183
        %1557 = vmatprep.subr.bf16.mxu0 %v1178
        %1558 = vmatpush2.bf16.msra.mxu0 %v1177
        %1559 = vmatprep.subr.bf16.mxu0 %v1172
        %1560 = vmatpush2.bf16.msra.mxu0 %v1171
        %1561 = vmatprep.subr.bf16.mxu0 %v1166
        %1562 = vmatpush2.bf16.msra.mxu0 %v1165
        %1563 = vmatprep.mubr.bf16.mxu0 %v682
        %1564 = vmatmul.mubr.bf16.gmra.mxu0 %v681
        %v1565 = vpop.f32.mrf.mxu0
        %v1566 = vadd.f32 %v814, %v1565
        %v1567 = vpop.f32.mrf.mxu0
        %v1568 = vadd.f32 %v818, %v1567
        %v1569 = vpop.f32.mrf.mxu0
        %v1570 = vadd.f32 %v814, %v1569
        %v1571 = vpop.f32.mrf.mxu0
        %v1572 = vadd.f32 %v818, %v1571
        %1573 = vmatprep.mubr.bf16.mxu0 %v684
        %1574 = vmatmul.mubr.bf16.gmra.mxu0 %v683
        %v1575 = vpop.f32.mrf.mxu0
        %v1576 = vadd.f32 %v814, %v1575
        %v1577 = vpop.f32.mrf.mxu0
        %v1578 = vadd.f32 %v818, %v1577
        %v1579 = vpop.f32.mrf.mxu0
        %v1580 = vadd.f32 %v814, %v1579
        %v1581 = vpop.f32.mrf.mxu0
        %v1582 = vadd.f32 %v818, %v1581
        %1583 = vmatprep.mubr.bf16.mxu0 %v686
        %1584 = vmatmul.mubr.bf16.gmra.mxu0 %v685
        %v1585 = vpop.f32.mrf.mxu0
        %v1586 = vadd.f32 %v814, %v1585
        %v1587 = vpop.f32.mrf.mxu0
        %v1588 = vadd.f32 %v818, %v1587
        %v1589 = vpop.f32.mrf.mxu0
        %v1590 = vadd.f32 %v814, %v1589
        %v1591 = vpop.f32.mrf.mxu0
        %v1592 = vadd.f32 %v818, %v1591
        %1593 = vmatprep.mubr.bf16.mxu0 %v688
        %1594 = vmatmul.mubr.bf16.gmra.mxu0 %v687
        %v1595 = vpop.f32.mrf.mxu0
        %v1596 = vadd.f32 %v814, %v1595
        %v1597 = vpop.f32.mrf.mxu0
        %v1598 = vadd.f32 %v818, %v1597
        %v1599 = vpop.f32.mrf.mxu0
        %v1600 = vadd.f32 %v814, %v1599
        %v1601 = vpop.f32.mrf.mxu0
        %v1602 = vadd.f32 %v818, %v1601
        %1603 = vmatprep.mubr.bf16.mxu0 %v690
        %1604 = vmatmul.mubr.bf16.gmra.mxu0 %v689
        %v1605 = vpop.f32.mrf.mxu0
        %v1606 = vadd.f32 %v814, %v1605
        %v1607 = vpop.f32.mrf.mxu0
        %v1608 = vadd.f32 %v818, %v1607
        %v1609 = vpop.f32.mrf.mxu0
        %v1610 = vadd.f32 %v814, %v1609
        %v1611 = vpop.f32.mrf.mxu0
        %v1612 = vadd.f32 %v818, %v1611
        %1613 = vmatprep.mubr.bf16.mxu0 %v692
        %1614 = vmatmul.mubr.bf16.gmra.mxu0 %v691
        %v1615 = vpop.f32.mrf.mxu0
        %v1616 = vadd.f32 %v814, %v1615
        %v1617 = vpop.f32.mrf.mxu0
        %v1618 = vadd.f32 %v818, %v1617
        %v1619 = vpop.f32.mrf.mxu0
        %v1620 = vadd.f32 %v814, %v1619
        %v1621 = vpop.f32.mrf.mxu0
        %v1622 = vadd.f32 %v818, %v1621
        %1623 = vmatprep.mubr.bf16.mxu0 %v694
        %1624 = vmatmul.mubr.bf16.gmra.mxu0 %v693
        %v1625 = vpop.f32.mrf.mxu0
        %v1626 = vadd.f32 %v814, %v1625
        %v1627 = vpop.f32.mrf.mxu0
        %v1628 = vadd.f32 %v818, %v1627
        %v1629 = vpop.f32.mrf.mxu0
        %v1630 = vadd.f32 %v814, %v1629
        %v1631 = vpop.f32.mrf.mxu0
        %v1632 = vadd.f32 %v818, %v1631
        %1633 = vmatprep.mubr.bf16.mxu0 %v696
        %1634 = vmatmul.mubr.bf16.gmra.mxu0 %v695
        %v1635 = vpop.f32.mrf.mxu0
        %v1636 = vadd.f32 %v814, %v1635
        %v1637 = vpop.f32.mrf.mxu0
        %v1638 = vadd.f32 %v818, %v1637
        %v1639 = vpop.f32.mrf.mxu0
        %v1640 = vadd.f32 %v814, %v1639
        %v1641 = vpop.f32.mrf.mxu0
        %v1642 = vadd.f32 %v818, %v1641
        %1643 = vdwg.mxu0
        %v1644 = vpack.c.bf16 %v1344, %v1340
        %v1645 = vpack.c.bf16 %v1346, %v1342
        %v1646 = vpack.c.bf16 %v1457, %v1453
        %v1647 = vpack.c.bf16 %v1459, %v1455
        %v1648 = vpack.c.bf16 %v1570, %v1566
        %v1649 = vpack.c.bf16 %v1572, %v1568
        %v1650 = vpack.c.bf16 %v1354, %v1350
        %v1651 = vpack.c.bf16 %v1356, %v1352
        %v1652 = vpack.c.bf16 %v1467, %v1463
        %v1653 = vpack.c.bf16 %v1469, %v1465
        %v1654 = vpack.c.bf16 %v1580, %v1576
        %v1655 = vpack.c.bf16 %v1582, %v1578
        %v1656 = vpack.c.bf16 %v1364, %v1360
        %v1657 = vpack.c.bf16 %v1366, %v1362
        %v1658 = vpack.c.bf16 %v1477, %v1473
        %v1659 = vpack.c.bf16 %v1479, %v1475
        %v1660 = vpack.c.bf16 %v1590, %v1586
        %v1661 = vpack.c.bf16 %v1592, %v1588
        %v1662 = vpack.c.bf16 %v1374, %v1370
        %v1663 = vpack.c.bf16 %v1376, %v1372
        %v1664 = vpack.c.bf16 %v1487, %v1483
        %v1665 = vpack.c.bf16 %v1489, %v1485
        %v1666 = vpack.c.bf16 %v1600, %v1596
        %v1667 = vpack.c.bf16 %v1602, %v1598
        %v1668 = vpack.c.bf16 %v1384, %v1380
        %v1669 = vpack.c.bf16 %v1386, %v1382
        %v1670 = vpack.c.bf16 %v1497, %v1493
        %v1671 = vpack.c.bf16 %v1499, %v1495
        %v1672 = vpack.c.bf16 %v1610, %v1606
        %v1673 = vpack.c.bf16 %v1612, %v1608
        %v1674 = vpack.c.bf16 %v1394, %v1390
        %v1675 = vpack.c.bf16 %v1396, %v1392
        %v1676 = vpack.c.bf16 %v1507, %v1503
        %v1677 = vpack.c.bf16 %v1509, %v1505
        %v1678 = vpack.c.bf16 %v1620, %v1616
        %v1679 = vpack.c.bf16 %v1622, %v1618
        %v1680 = vpack.c.bf16 %v1404, %v1400
        %v1681 = vpack.c.bf16 %v1406, %v1402
        %v1682 = vpack.c.bf16 %v1517, %v1513
        %v1683 = vpack.c.bf16 %v1519, %v1515
        %v1684 = vpack.c.bf16 %v1630, %v1626
        %v1685 = vpack.c.bf16 %v1632, %v1628
        %v1686 = vpack.c.bf16 %v1414, %v1410
        %v1687 = vpack.c.bf16 %v1416, %v1412
        %v1688 = vpack.c.bf16 %v1527, %v1523
        %v1689 = vpack.c.bf16 %v1529, %v1525
        %v1690 = vpack.c.bf16 %v1640, %v1636
        %v1691 = vpack.c.bf16 %v1642, %v1638
        %v1740 = vunpack.c.l.b16 %v1644
        %v1741 = vunpack.c.l.b16 %v1645
        %v1742 = vunpack.c.l.b16 %v1646
        %v1743 = vunpack.c.l.b16 %v1647
        %v1744 = vunpack.c.l.b16 %v1648
        %v1745 = vunpack.c.l.b16 %v1649
        %v1746 = vunpack.c.h.b16 %v1644
        %v1747 = vunpack.c.h.b16 %v1645
        %v1748 = vunpack.c.h.b16 %v1646
        %v1749 = vunpack.c.h.b16 %v1647
        %v1750 = vunpack.c.h.b16 %v1648
        %v1751 = vunpack.c.h.b16 %v1649
        %v1752 = vunpack.c.l.b16 %v1650
        %v1753 = vunpack.c.l.b16 %v1651
        %v1754 = vunpack.c.l.b16 %v1652
        %v1755 = vunpack.c.l.b16 %v1653
        %v1756 = vunpack.c.l.b16 %v1654
        %v1757 = vunpack.c.l.b16 %v1655
        %v1758 = vunpack.c.h.b16 %v1650
        %v1759 = vunpack.c.h.b16 %v1651
        %v1760 = vunpack.c.h.b16 %v1652
        %v1761 = vunpack.c.h.b16 %v1653
        %v1762 = vunpack.c.h.b16 %v1654
        %v1763 = vunpack.c.h.b16 %v1655
        %v1764 = vunpack.c.l.b16 %v1656
        %v1765 = vunpack.c.l.b16 %v1657
        %v1766 = vunpack.c.l.b16 %v1658
        %v1767 = vunpack.c.l.b16 %v1659
        %v1768 = vunpack.c.l.b16 %v1660
        %v1769 = vunpack.c.l.b16 %v1661
        %v1770 = vunpack.c.h.b16 %v1656
        %v1771 = vunpack.c.h.b16 %v1657
        %v1772 = vunpack.c.h.b16 %v1658
        %v1773 = vunpack.c.h.b16 %v1659
        %v1774 = vunpack.c.h.b16 %v1660
        %v1775 = vunpack.c.h.b16 %v1661
        %v1776 = vunpack.c.l.b16 %v1662
        %v1777 = vunpack.c.l.b16 %v1663
        %v1778 = vunpack.c.l.b16 %v1664
        %v1779 = vunpack.c.l.b16 %v1665
        %v1780 = vunpack.c.l.b16 %v1666
        %v1781 = vunpack.c.l.b16 %v1667
        %v1782 = vunpack.c.h.b16 %v1662
        %v1783 = vunpack.c.h.b16 %v1663
        %v1784 = vunpack.c.h.b16 %v1664
        %v1785 = vunpack.c.h.b16 %v1665
        %v1786 = vunpack.c.h.b16 %v1666
        %v1787 = vunpack.c.h.b16 %v1667
        %v1788 = vunpack.c.l.b16 %v1668
        %v1789 = vunpack.c.l.b16 %v1669
        %v1790 = vunpack.c.l.b16 %v1670
        %v1791 = vunpack.c.l.b16 %v1671
        %v1792 = vunpack.c.l.b16 %v1672
        %v1793 = vunpack.c.l.b16 %v1673
        %v1794 = vunpack.c.h.b16 %v1668
        %v1795 = vunpack.c.h.b16 %v1669
        %v1796 = vunpack.c.h.b16 %v1670
        %v1797 = vunpack.c.h.b16 %v1671
        %v1798 = vunpack.c.h.b16 %v1672
        %v1799 = vunpack.c.h.b16 %v1673
        %v1800 = vunpack.c.l.b16 %v1674
        %v1801 = vunpack.c.l.b16 %v1675
        %v1802 = vunpack.c.l.b16 %v1676
        %v1803 = vunpack.c.l.b16 %v1677
        %v1804 = vunpack.c.l.b16 %v1678
        %v1805 = vunpack.c.l.b16 %v1679
        %v1806 = vunpack.c.h.b16 %v1674
        %v1807 = vunpack.c.h.b16 %v1675
        %v1808 = vunpack.c.h.b16 %v1676
        %v1809 = vunpack.c.h.b16 %v1677
        %v1810 = vunpack.c.h.b16 %v1678
        %v1811 = vunpack.c.h.b16 %v1679
        %v1812 = vunpack.c.l.b16 %v1680
        %v1813 = vunpack.c.l.b16 %v1681
        %v1814 = vunpack.c.l.b16 %v1682
        %v1815 = vunpack.c.l.b16 %v1683
        %v1816 = vunpack.c.l.b16 %v1684
        %v1817 = vunpack.c.l.b16 %v1685
        %v1818 = vunpack.c.h.b16 %v1680
        %v1819 = vunpack.c.h.b16 %v1681
        %v1820 = vunpack.c.h.b16 %v1682
        %v1821 = vunpack.c.h.b16 %v1683
        %v1822 = vunpack.c.h.b16 %v1684
        %v1823 = vunpack.c.h.b16 %v1685
        %v1824 = vunpack.c.l.b16 %v1686
        %v1825 = vunpack.c.l.b16 %v1687
        %v1826 = vunpack.c.l.b16 %v1688
        %v1827 = vunpack.c.l.b16 %v1689
        %v1828 = vunpack.c.l.b16 %v1690
        %v1829 = vunpack.c.l.b16 %v1691
        %v1830 = vunpack.c.h.b16 %v1686
        %v1831 = vunpack.c.h.b16 %v1687
        %v1832 = vunpack.c.h.b16 %v1688
        %v1833 = vunpack.c.h.b16 %v1689
        %v1834 = vunpack.c.h.b16 %v1690
        %v1835 = vunpack.c.h.b16 %v1691
        %v1836 = vpack.c.b16 %v1741, %v1740
        %v1837 = vpack.c.b16 %v1743, %v1742
        %v1838 = vpack.c.b16 %v1745, %v1744
        %v1839 = vpack.c.b16 %v1747, %v1746
        %v1840 = vpack.c.b16 %v1749, %v1748
        %v1841 = vpack.c.b16 %v1751, %v1750
        %v1842 = vpack.c.b16 %v1753, %v1752
        %v1843 = vpack.c.b16 %v1755, %v1754
        %v1844 = vpack.c.b16 %v1757, %v1756
        %v1845 = vpack.c.b16 %v1759, %v1758
        %v1846 = vpack.c.b16 %v1761, %v1760
        %v1847 = vpack.c.b16 %v1763, %v1762
        %v1848 = vpack.c.b16 %v1765, %v1764
        %v1849 = vpack.c.b16 %v1767, %v1766
        %v1850 = vpack.c.b16 %v1769, %v1768
        %v1851 = vpack.c.b16 %v1771, %v1770
        %v1852 = vpack.c.b16 %v1773, %v1772
        %v1853 = vpack.c.b16 %v1775, %v1774
        %v1854 = vpack.c.b16 %v1777, %v1776
        %v1855 = vpack.c.b16 %v1779, %v1778
        %v1856 = vpack.c.b16 %v1781, %v1780
        %v1857 = vpack.c.b16 %v1783, %v1782
        %v1858 = vpack.c.b16 %v1785, %v1784
        %v1859 = vpack.c.b16 %v1787, %v1786
        %v1860 = vpack.c.b16 %v1789, %v1788
        %v1861 = vpack.c.b16 %v1791, %v1790
        %v1862 = vpack.c.b16 %v1793, %v1792
        %v1863 = vpack.c.b16 %v1795, %v1794
        %v1864 = vpack.c.b16 %v1797, %v1796
        %v1865 = vpack.c.b16 %v1799, %v1798
        %v1866 = vpack.c.b16 %v1801, %v1800
        %v1867 = vpack.c.b16 %v1803, %v1802
        %v1868 = vpack.c.b16 %v1805, %v1804
        %v1869 = vpack.c.b16 %v1807, %v1806
        %v1870 = vpack.c.b16 %v1809, %v1808
        %v1871 = vpack.c.b16 %v1811, %v1810
        %v1872 = vpack.c.b16 %v1813, %v1812
        %v1873 = vpack.c.b16 %v1815, %v1814
        %v1874 = vpack.c.b16 %v1817, %v1816
        %v1875 = vpack.c.b16 %v1819, %v1818
        %v1876 = vpack.c.b16 %v1821, %v1820
        %v1877 = vpack.c.b16 %v1823, %v1822
        %v1878 = vpack.c.b16 %v1825, %v1824
        %v1879 = vpack.c.b16 %v1827, %v1826
        %v1880 = vpack.c.b16 %v1829, %v1828
        %v1881 = vpack.c.b16 %v1831, %v1830
        %v1882 = vpack.c.b16 %v1833, %v1832
        %v1883 = vpack.c.b16 %v1835, %v1834
        %1932 = vst [vmem:[%s301] sm:$0xff] %v1836
        %1933 = vst [vmem:[%s301 + $0x8] sm:$0xff] %v1837
        %1934 = vst [vmem:[%s301 + $0x10] sm:$0xff] %v1838
        %1935 = vst [vmem:[%s301 + $0x18] sm:$0xff] %v1839
        %1936 = vst [vmem:[%s301 + $0x20] sm:$0xff] %v1840
        %1937 = vst [vmem:[%s301 + $0x28] sm:$0xff] %v1841
        %1938 = vst [vmem:[%s301 + $0x30] sm:$0xff] %v1842
        %1939 = vst [vmem:[%s301 + $0x38] sm:$0xff] %v1843
        %1940 = vst [vmem:[%s301 + $0x40] sm:$0xff] %v1844
        %1941 = vst [vmem:[%s301 + $0x48] sm:$0xff] %v1845
        %1942 = vst [vmem:[%s301 + $0x50] sm:$0xff] %v1846
        %1943 = vst [vmem:[%s301 + $0x58] sm:$0xff] %v1847
        %1944 = vst [vmem:[%s301 + $0x60] sm:$0xff] %v1848
        %1945 = vst [vmem:[%s301 + $0x68] sm:$0xff] %v1849
        %1946 = vst [vmem:[%s301 + $0x70] sm:$0xff] %v1850
        %1947 = vst [vmem:[%s301 + $0x78] sm:$0xff] %v1851
        %1948 = vst [vmem:[%s301 + $0x80] sm:$0xff] %v1852
        %1949 = vst [vmem:[%s301 + $0x88] sm:$0xff] %v1853
        %1950 = vst [vmem:[%s301 + $0x90] sm:$0xff] %v1854
        %1951 = vst [vmem:[%s301 + $0x98] sm:$0xff] %v1855
        %1952 = vst [vmem:[%s301 + $0xa0] sm:$0xff] %v1856
        %1953 = vst [vmem:[%s301 + $0xa8] sm:$0xff] %v1857
        %1954 = vst [vmem:[%s301 + $0xb0] sm:$0xff] %v1858
        %1955 = vst [vmem:[%s301 + $0xb8] sm:$0xff] %v1859
        %1956 = vst [vmem:[%s301 + $0xc0] sm:$0xff] %v1860
        %1957 = vst [vmem:[%s301 + $0xc8] sm:$0xff] %v1861
        %1958 = vst [vmem:[%s301 + $0xd0] sm:$0xff] %v1862
        %1959 = vst [vmem:[%s301 + $0xd8] sm:$0xff] %v1863
        %1960 = vst [vmem:[%s301 + $0xe0] sm:$0xff] %v1864
        %1961 = vst [vmem:[%s301 + $0xe8] sm:$0xff] %v1865
        %1962 = vst [vmem:[%s301 + $0xf0] sm:$0xff] %v1866
        %1963 = vst [vmem:[%s301 + $0xf8] sm:$0xff] %v1867
        %1964 = vst [vmem:[%s301 + $0x100] sm:$0xff] %v1868
        %1965 = vst [vmem:[%s301 + $0x108] sm:$0xff] %v1869
        %1966 = vst [vmem:[%s301 + $0x110] sm:$0xff] %v1870
        %1967 = vst [vmem:[%s301 + $0x118] sm:$0xff] %v1871
        %1968 = vst [vmem:[%s301 + $0x120] sm:$0xff] %v1872
        %1969 = vst [vmem:[%s301 + $0x128] sm:$0xff] %v1873
        %1970 = vst [vmem:[%s301 + $0x130] sm:$0xff] %v1874
        %1971 = vst [vmem:[%s301 + $0x138] sm:$0xff] %v1875
        %1972 = vst [vmem:[%s301 + $0x140] sm:$0xff] %v1876
        %1973 = vst [vmem:[%s301 + $0x148] sm:$0xff] %v1877
        %1974 = vst [vmem:[%s301 + $0x150] sm:$0xff] %v1878
        %1975 = vst [vmem:[%s301 + $0x158] sm:$0xff] %v1879
        %1976 = vst [vmem:[%s301 + $0x160] sm:$0xff] %v1880
        %1977 = vst [vmem:[%s301 + $0x168] sm:$0xff] %v1881
        %1978 = vst [vmem:[%s301 + $0x170] sm:$0xff] %v1882
        %1979 = vst [vmem:[%s301 + $0x178] sm:$0xff] %v1883
        %s1980 = sand.u32 %s158, 1
        %s1981 = scalar_lea.sflag [#allocation4], %s1980
        %s1982 = sand.u32 %s158, 1
        %s1983 = smul.addr %s1982, 384
        %s1984 = scalar_lea.vmem [#allocation10], %s1983
        // Predicated region
        $region57: #{tpu_custom_call.1} parent=39 // pred_check
          %p1985 = pneg %p168
        $region58: #{tpu_custom_call.1} parent=39 // pred_check_branch
          %1987 = sbr.rel (%p1985) target = $region60
        $region59: #{tpu_custom_call.1} parent=39 // pred_region
          %s1988 = smul.u32 16, %s29
          %s1990 = ssub.s32 6144, 6144
          %1991 = vsyncadd %s1981, %s1990
          %s1992 = smul.addr %s1988, 6
          %s1993 = smul.addr %s28, 192
          %s1994 = sadd.s32 %s1992, %s1993
          %s1995 = smul.addr %s1994, 64
          %s1996 = scalar_lea.hbm %s5, %s1995
          %s1997 = sshll.u32 %s1984, 4
          %s1998 = int_to_ptr.vmem [resolvable:$true] %s1997
          %2003 = dma.vmem_to_hbm [thread:$0]  %s1998, 6144, %s1996, %s1981, 384, 384, 24
        $region60: #{tpu_custom_call.1} parent=39 // pred_fallthru
          _
      $region40: #{tpu_custom_call.1} parent=5 // pred_fallthru
        _
      %p2004 = scmp.le.s32.totalorder 2, %s19
      // Predicated region
      $region61: #{tpu_custom_call.1} parent=5 // pred_check
        %p2005 = pneg %p2004
      $region62: #{tpu_custom_call.1} parent=5 // pred_check_branch
        %2007 = sbr.rel (%p2005) target = $region64
      $region63: #{tpu_custom_call.1} parent=5 // pred_region
        %s2008 = ssub.s32 %s19, 2
        // Predicated region
        $region65: #{tpu_custom_call.1} parent=63 // pred_check
          %p2009 = pneg %p174
        $region66: #{tpu_custom_call.1} parent=63 // pred_check_branch
          %2011 = sbr.rel (%p2009) target = $region68
        $region67: #{tpu_custom_call.1} parent=63 // pred_region
          %s2012 = sand.u32 %s159, 1
          %s2013 = scalar_lea.sflag [#allocation4], %s2012
          %s2014 = sand.u32 %s159, 1
          %s2015 = smul.addr %s2014, 384
          %s2016 = scalar_lea.vmem [#allocation10], %s2015
          %2017 = dma.done %s2013, 6144
        $region68: #{tpu_custom_call.1} parent=63 // pred_fallthru
          _
      $region64: #{tpu_custom_call.1} parent=5 // pred_fallthru
        _
    $region6: #{tpu_custom_call.1} parent=1 // loop_footer
      %s23 = sadd.s32 1, %s19
    $region7: #{tpu_custom_call.1} parent=1 // loop_footer_branch
      %18 = sbr.rel target = $region3
    $region8: #{tpu_custom_call.1} parent=1 // loop_exit
      _
    %2018 = vsyncpa [#allocation3], 1
    %s2019 = scalar_lea.sflag [#allocation3], 1
    %2020 = vsyncpa %s2019, 1
    %2021 = vsyncpa [#allocation6], 1
    %2022 = vsyncpa [#allocation9], 1
    %2023 = vsyncpa [#allocation4], 1
    %s2024 = scalar_lea.sflag [#allocation4], 1
    %2025 = vsyncpa %s2024, 1

</llo_original>
